<compile_context>
chip_gen: v6e
topology: v6e:2x2x1
jax: 0.10.0
libtpu: 0.0.40
codegen_flags: <defaults>
</compile_context>

<pallas_src>
import functools

import numpy as np
import jax
import jax.numpy as jnp
from jax.experimental import pallas as pl
from jax.experimental.pallas import tpu as pltpu

# ---- static hyper-parameters (mirror Model.__init__) ----
CELL = 0.05
RADIUS = 2.1 * CELL            # create_kernels(radius=2.1*0.05)
SIGMA = RADIUS                 # KP influence extent (linear correlation)
SHELLS = (1, 8, 16)
K = sum(SHELLS)                # 25 kernel points
KPAD = 32                      # kernel-point axis padded to a sublane multiple
NB = 10                        # KPConv neighbor_count
C_OUT = 64                     # kpconv1 output_feature_count
CLASS_COUNT = 10
CPAD = 128                     # class axis padded to a full lane tile
POOL_CELL = 2 * CELL           # grid_max_pool cell_size
INV_POOL_CELL = float(np.float32(1.0 / POOL_CELL))   # 10.0 exactly
N_POINTS = 128
R = N_POINTS * NB              # 1280 (point, neighbor) rows
BATCH = 2


def make_kernel_points() -> np.ndarray:
    """Deterministic stand-in for create_kernels(dim=3, shells=[1,8,16], radius=RADIUS)."""
    pts = [np.zeros((1, 3), np.float32)]
    # shell of 8: normalized cube corners at half radius
    corners = np.array([[sx, sy, sz] for sx in (-1.0, 1.0) for sy in (-1.0, 1.0)
                        for sz in (-1.0, 1.0)], np.float32)
    corners /= np.linalg.norm(corners, axis=1, keepdims=True)
    pts.append(corners * (0.5 * RADIUS))
    # shell of 16: Fibonacci sphere at full radius
    n = 16
    i = np.arange(n, dtype=np.float64) + 0.5
    phi = np.arccos(1.0 - 2.0 * i / n)
    theta = np.pi * (1.0 + 5.0 ** 0.5) * i
    dirs = np.stack([np.sin(phi) * np.cos(theta),
                     np.sin(phi) * np.sin(theta),
                     np.cos(phi)], -1)
    pts.append((dirs * RADIUS).astype(np.float32))
    return np.concatenate(pts, axis=0).astype(np.float32)   # (25, 3)


def _kpconv_classifier_kernel(pts_s_ref, pts_l_ref, rel_ref, kpt_ref, wfold_ref,
                              bias_ref, o_ref, *, inv_sigma, inv_cell, bb):
    # pts_s_ref : (BB, N, 3)       points, point index on sublanes
    # pts_l_ref : (BB, 3, N)       points, point index on lanes
    # rel_ref   : (BB, 3*NB, N)    kNN offsets, row = coord*NB + neighbor
    # kpt_ref   : (KPAD, 3)        kernel points (rows >= K are zero)
    # wfold_ref : (KPAD, CPAD)     w_kp @ w_cls, zero-padded rows/cols (kills pad garbage)
    # bias_ref  : (1, CPAD)
    # o_ref     : (BB, 1, CPAD)
    kpt = kpt_ref[...]
    kx = kpt[:, 0:1]
    ky = kpt[:, 1:2]
    kz = kpt[:, 2:3]
    wfold = wfold_ref[...]
    bias = bias_ref[...]
    for c in range(bb):                       # static unroll over clouds in this block
        # ---- voxel weights: grid pooling (per-voxel MEAN) + mean-over-voxels
        #      folded into one weight per point  w[i] = 1 / (V * count[voxel(i)]),
        #      computed unique-free from pairwise same-voxel counts on the VPU.
        vox_s = jnp.floor(pts_s_ref[c] * inv_cell)                        # (N, 3)
        vox_l = jnp.floor(pts_l_ref[c] * inv_cell)                        # (3, N)
        same = (vox_s[:, 0:1] == vox_l[0:1, :])
        same = jnp.logical_and(same, vox_s[:, 1:2] == vox_l[1:2, :])
        same = jnp.logical_and(same, vox_s[:, 2:3] == vox_l[2:3, :])      # (N, N)
        cnt = jnp.sum(same.astype(jnp.float32), axis=0, keepdims=True)    # (1, N)
        inv_cnt = 1.0 / cnt
        n_vox = jnp.sum(inv_cnt, axis=1, keepdims=True)                   # (1, 1) == #voxels
        w_point = inv_cnt / n_vox                                         # (1, N)

        # ---- rigid KPConv influences (input features are ones, C_in == 1);
        #      d2 accumulated in place to keep vreg pressure low.
        relc = rel_ref[c]                                                 # (3*NB, N), 4 vregs
        per_point = jnp.zeros((KPAD, N_POINTS), jnp.float32)
        for n in range(NB):
            dx = relc[n:n + 1, :] - kx                                    # (KPAD, N)
            d2 = dx * dx
            dy = relc[NB + n:NB + n + 1, :] - ky
            d2 = d2 + dy * dy
            dz = relc[2 * NB + n:2 * NB + n + 1, :] - kz
            d2 = d2 + dz * dz
            per_point = per_point + jnp.maximum(0.0, 1.0 - jnp.sqrt(d2) * inv_sigma)

        # ---- neighbor-summed influence -> pooled feature -> classifier, all folded:
        #      logits = sum_k (sum_i w[i]*infl[k,i]) * (w_kp @ w_cls)[k,:] + b.
        wsum = jnp.sum(per_point * w_point, axis=-1, keepdims=True)       # (KPAD, 1)
        o_ref[c] = jnp.sum(wsum * wfold, axis=0, keepdims=True) + bias    # (1, CPAD)


def _preprocess_cloud(points):
    """Static-shape XLA glue for one cloud: kNN neighbor offsets, neighbor-major rows."""
    d2 = jnp.sum((points[:, None, :] - points[None, :, :]) ** 2, axis=-1)   # (N, N)
    _, idx = jax.lax.top_k(-d2, NB)                                         # (N, NB), self incl.
    rel = points[idx] - points[:, None, :]                                  # (N, NB, 3)
    # row = coord * NB + neighbor; columns = point index (lane-dense per neighbor)
    return jnp.transpose(rel, (2, 1, 0)).reshape(3 * NB, N_POINTS)          # (3*NB, N)


@jax.jit
def model_forward(points_batch, w_kp, w_cls, b_cls, kpt_pad):
    """Batched Model.forward: points_batch (B, N, 3) -> logits (B, class_count)."""
    batch = points_batch.shape[0]
    rel_rows = jax.vmap(_preprocess_cloud)(points_batch)          # (B, 3*NB, N)
    pts_sub = points_batch                                        # (B, N, 3)
    pts_lane = jnp.transpose(points_batch, (0, 2, 1))             # (B, 3, N)

    # Fold KPConv output weights and classifier: (25,64)@(64,10) -> zero-padded
    # (KPAD, CPAD).  Zero pad rows neutralize the 7 padded kernel points; zero
    # pad columns keep the lane-dense output exact.
    w_fold = jnp.zeros((KPAD, CPAD), jnp.float32).at[:K, :CLASS_COUNT].set(
        jnp.dot(w_kp, w_cls, precision=jax.lax.Precision.HIGHEST))
    bias_pad = jnp.zeros((1, CPAD), jnp.float32).at[:, :CLASS_COUNT].set(b_cls)

    # Batch blocking: BB clouds per grid step; keep the grid length at 2 when
    # possible so both v7x TensorCores are busy while amortizing step overhead.
    bb = 1 if batch <= 1 else max(1, min(32, batch // 2))
    n_blocks = pl.cdiv(batch, bb)
    pad = n_blocks * bb - batch
    if pad:
        rel_rows = jnp.pad(rel_rows, ((0, pad), (0, 0), (0, 0)))
        pts_sub = jnp.pad(pts_sub, ((0, pad), (0, 0), (0, 0)))
        pts_lane = jnp.pad(pts_lane, ((0, pad), (0, 0), (0, 0)))

    kern = functools.partial(_kpconv_classifier_kernel,
                             inv_sigma=1.0 / SIGMA,
                             inv_cell=INV_POOL_CELL,
                             bb=bb)
    out = pl.pallas_call(
        kern,
        out_shape=jax.ShapeDtypeStruct((n_blocks * bb, 1, CPAD), jnp.float32),
        grid=(n_blocks,),
        in_specs=[
            pl.BlockSpec((bb, N_POINTS, 3), lambda g: (g, 0, 0)),        # points (sublane layout)
            pl.BlockSpec((bb, 3, N_POINTS), lambda g: (g, 0, 0)),        # points (lane layout)
            pl.BlockSpec((bb, 3 * NB, N_POINTS), lambda g: (g, 0, 0)),   # kNN offsets
            pl.BlockSpec((KPAD, 3), lambda g: (0, 0)),                   # kernel points
            pl.BlockSpec((KPAD, CPAD), lambda g: (0, 0)),                # w_kp @ w_cls (padded)
            pl.BlockSpec((1, CPAD), lambda g: (0, 0)),                   # classifier bias (padded)
        ],
        out_specs=pl.BlockSpec((bb, 1, CPAD), lambda g: (g, 0, 0)),
        compiler_params=pltpu.CompilerParams(
            dimension_semantics=("parallel",)),
    )(pts_sub, pts_lane, rel_rows, kpt_pad, w_fold, bias_pad)
    return out[:batch, 0, :CLASS_COUNT]                                  # (B, class_count)


def reference_forward(points, w_kp, w_cls, b_cls, kernel_points):
    """NumPy re-implementation of Model.forward semantics for one cloud."""
    pts = np.asarray(points, np.float32)
    d2 = ((pts[:, None, :] - pts[None, :, :]) ** 2).sum(-1)
    idx = np.argsort(d2, axis=1)[:, :NB]                            # (N, NB) kNN (self incl.)
    rel = pts[idx] - pts[:, None, :]                                # (N, NB, 3)
    dist = np.linalg.norm(rel[:, :, None, :] - kernel_points[None, None], axis=-1)
    infl = np.maximum(0.0, 1.0 - dist / SIGMA)                      # (N, NB, K)
    feats2 = infl.sum(axis=1) @ np.asarray(w_kp, np.float64)        # KPConv, ones features
    # grid_max_pool as written in torch: per-voxel MEAN of features
    vox = np.floor(pts * np.float32(INV_POOL_CELL)).astype(np.int64)
    uniq, inv, counts = np.unique(vox, axis=0, return_inverse=True, return_counts=True)
    feats3 = np.zeros((uniq.shape[0], C_OUT), np.float64)
    np.add.at(feats3, inv, feats2)
    feats3 /= counts[:, None]
    pooled = feats3.mean(axis=0)                                    # features3.mean(dim=-2)
    return pooled @ np.asarray(w_cls, np.float64) + np.asarray(b_cls, np.float64)[0]


if __name__ == "__main__":
    key = jax.random.PRNGKey(0)
    pts_key, w1_key, wc_key, bc_key = jax.random.split(key, 4)

    # batch of point clouds, each (N, 3)
    points_batch = jax.random.uniform(pts_key, (BATCH, N_POINTS, 3), jnp.float32, 0.0, 0.5)

    kernel_points = make_kernel_points()                            # (25, 3)
    kpt_pad_np = np.zeros((KPAD, 3), np.float32)
    kpt_pad_np[:K] = kernel_points
    kpt_pad = jnp.asarray(kpt_pad_np)

    # KPConv weights: (K, C_in=1, C_out=64) with C_in squeezed -> (25, 64)
    w_kp = jax.random.normal(w1_key, (K, C_OUT), jnp.float32) / np.sqrt(K)
    # nn.Linear(64, class_count): weight stored pre-transposed as (64, C)
    w_cls = jax.random.normal(wc_key, (C_OUT, CLASS_COUNT), jnp.float32) / np.sqrt(C_OUT)
    b_cls = 0.01 * jax.random.normal(bc_key, (1, CLASS_COUNT), jnp.float32)

    logits = model_forward(points_batch, w_kp, w_cls, b_cls, kpt_pad)
    jax.block_until_ready(logits)

    for b in range(BATCH):
        ref = reference_forward(points_batch[b], w_kp, w_cls, b_cls, kernel_points)
        np.testing.assert_allclose(np.asarray(logits[b]), ref, rtol=1e-2, atol=1e-2)

    print("KERNEL_OK")
</pallas_src>

<mosaic_0001>
module attributes {stable_mosaic.version = 11 : i64} {
  func.func @_kpconv_classifier_kernel(%arg0: i32, %arg1: memref<1x128x3xf32, #tpu.memory_space<vmem>>, %arg2: memref<1x3x128xf32, #tpu.memory_space<vmem>>, %arg3: memref<1x30x128xf32, #tpu.memory_space<vmem>>, %arg4: memref<32x3xf32, #tpu.memory_space<vmem>>, %arg5: memref<32x128xf32, #tpu.memory_space<vmem>>, %arg6: memref<1x128xf32, #tpu.memory_space<vmem>>, %arg7: memref<1x1x128xf32, #tpu.memory_space<vmem>>) attributes {dimension_semantics = [#tpu.dimension_semantics<parallel>], iteration_bounds = array<i64: 2>, scalar_prefetch = 0 : i64, scratch_operands = 0 : i64, tpu.core_type = #tpu.core_type<tc>, window_params = [{transform_indices = @transform_0, window_bounds = array<i64: 1, 128, 3>}, {transform_indices = @transform_1, window_bounds = array<i64: 1, 3, 128>}, {transform_indices = @transform_2, window_bounds = array<i64: 1, 30, 128>}, {pipeline_mode = #tpu.pipeline_mode<synchronous>, transform_indices = @transform_3, window_bounds = array<i64: 32, 3>}, {pipeline_mode = #tpu.pipeline_mode<synchronous>, transform_indices = @transform_4, window_bounds = array<i64: 32, 128>}, {pipeline_mode = #tpu.pipeline_mode<synchronous>, transform_indices = @transform_5, window_bounds = array<i64: 1, 128>}, {transform_indices = @transform_6, window_bounds = array<i64: 1, 1, 128>}]} {
    %c0 = arith.constant 0 : index
    %c0_0 = arith.constant 0 : index
    %0 = vector.load %arg4[%c0, %c0_0] : memref<32x3xf32, #tpu.memory_space<vmem>>, vector<32x3xf32>
    %1 = vector.extract_strided_slice %0 {offsets = [0, 0], sizes = [32, 1], strides = [1, 1]} : vector<32x3xf32> to vector<32x1xf32>
    %2 = vector.extract_strided_slice %0 {offsets = [0, 1], sizes = [32, 1], strides = [1, 1]} : vector<32x3xf32> to vector<32x1xf32>
    %3 = vector.extract_strided_slice %0 {offsets = [0, 2], sizes = [32, 1], strides = [1, 1]} : vector<32x3xf32> to vector<32x1xf32>
    %c0_1 = arith.constant 0 : index
    %c0_2 = arith.constant 0 : index
    %4 = vector.load %arg5[%c0_1, %c0_2] : memref<32x128xf32, #tpu.memory_space<vmem>>, vector<32x128xf32>
    %c0_3 = arith.constant 0 : index
    %c0_4 = arith.constant 0 : index
    %5 = vector.load %arg6[%c0_3, %c0_4] : memref<1x128xf32, #tpu.memory_space<vmem>>, vector<1x128xf32>
    %c0_5 = arith.constant 0 : index
    %c0_6 = arith.constant 0 : index
    %c0_7 = arith.constant 0 : index
    %6 = vector.load %arg1[%c0_5, %c0_6, %c0_7] : memref<1x128x3xf32, #tpu.memory_space<vmem>>, vector<1x128x3xf32>
    %7 = vector.shape_cast %6 : vector<1x128x3xf32> to vector<128x3xf32>
    %cst = arith.constant 1.000000e+01 : f32
    %8 = vector.broadcast %cst : f32 to vector<128x3xf32>
    %9 = arith.mulf %7, %8 : vector<128x3xf32>
    %10 = math.floor %9 : vector<128x3xf32>
    %c0_8 = arith.constant 0 : index
    %c0_9 = arith.constant 0 : index
    %c0_10 = arith.constant 0 : index
    %11 = vector.load %arg2[%c0_8, %c0_9, %c0_10] : memref<1x3x128xf32, #tpu.memory_space<vmem>>, vector<1x3x128xf32>
    %12 = vector.shape_cast %11 : vector<1x3x128xf32> to vector<3x128xf32>
    %cst_11 = arith.constant 1.000000e+01 : f32
    %13 = vector.broadcast %cst_11 : f32 to vector<3x128xf32>
    %14 = arith.mulf %12, %13 : vector<3x128xf32>
    %15 = math.floor %14 : vector<3x128xf32>
    %16 = vector.extract_strided_slice %10 {offsets = [0, 0], sizes = [128, 1], strides = [1, 1]} : vector<128x3xf32> to vector<128x1xf32>
    %17 = vector.extract_strided_slice %15 {offsets = [0, 0], sizes = [1, 128], strides = [1, 1]} : vector<3x128xf32> to vector<1x128xf32>
    %18 = vector.broadcast %16 : vector<128x1xf32> to vector<128x128xf32>
    %19 = vector.broadcast %17 : vector<1x128xf32> to vector<128x128xf32>
    %20 = arith.cmpf oeq, %18, %19 : vector<128x128xf32>
    %21 = vector.extract_strided_slice %10 {offsets = [0, 1], sizes = [128, 1], strides = [1, 1]} : vector<128x3xf32> to vector<128x1xf32>
    %22 = vector.extract_strided_slice %15 {offsets = [1, 0], sizes = [1, 128], strides = [1, 1]} : vector<3x128xf32> to vector<1x128xf32>
    %23 = vector.broadcast %21 : vector<128x1xf32> to vector<128x128xf32>
    %24 = vector.broadcast %22 : vector<1x128xf32> to vector<128x128xf32>
    %25 = arith.cmpf oeq, %23, %24 : vector<128x128xf32>
    %26 = arith.andi %20, %25 : vector<128x128xi1>
    %27 = vector.extract_strided_slice %10 {offsets = [0, 2], sizes = [128, 1], strides = [1, 1]} : vector<128x3xf32> to vector<128x1xf32>
    %28 = vector.extract_strided_slice %15 {offsets = [2, 0], sizes = [1, 128], strides = [1, 1]} : vector<3x128xf32> to vector<1x128xf32>
    %29 = vector.broadcast %27 : vector<128x1xf32> to vector<128x128xf32>
    %30 = vector.broadcast %28 : vector<1x128xf32> to vector<128x128xf32>
    %31 = arith.cmpf oeq, %29, %30 : vector<128x128xf32>
    %32 = arith.andi %26, %31 : vector<128x128xi1>
    %33 = arith.extui %32 : vector<128x128xi1> to vector<128x128xi32>
    %34 = arith.sitofp %33 : vector<128x128xi32> to vector<128x128xf32>
    %cst_12 = arith.constant dense<0.000000e+00> : vector<128xf32>
    %35 = vector.multi_reduction <add>, %34, %cst_12 [0] : vector<128x128xf32> to vector<128xf32>
    %36 = vector.shape_cast %35 : vector<128xf32> to vector<1x128xf32>
    %cst_13 = arith.constant 1.000000e+00 : f32
    %37 = vector.broadcast %cst_13 : f32 to vector<1x128xf32>
    %38 = arith.divf %37, %36 : vector<1x128xf32>
    %cst_14 = arith.constant dense<0.000000e+00> : vector<1xf32>
    %39 = vector.multi_reduction <add>, %38, %cst_14 [1] : vector<1x128xf32> to vector<1xf32>
    %40 = vector.shape_cast %39 : vector<1xf32> to vector<1x1xf32>
    %41 = vector.broadcast %40 : vector<1x1xf32> to vector<1x128xf32>
    %42 = arith.divf %38, %41 : vector<1x128xf32>
    %c0_15 = arith.constant 0 : index
    %c0_16 = arith.constant 0 : index
    %c0_17 = arith.constant 0 : index
    %43 = vector.load %arg3[%c0_15, %c0_16, %c0_17] : memref<1x30x128xf32, #tpu.memory_space<vmem>>, vector<1x30x128xf32>
    %44 = vector.shape_cast %43 : vector<1x30x128xf32> to vector<30x128xf32>
    %cst_18 = arith.constant 0.000000e+00 : f32
    %45 = vector.broadcast %cst_18 : f32 to vector<32x128xf32>
    %46 = vector.extract_strided_slice %44 {offsets = [0, 0], sizes = [1, 128], strides = [1, 1]} : vector<30x128xf32> to vector<1x128xf32>
    %47 = vector.broadcast %46 : vector<1x128xf32> to vector<32x128xf32>
    %48 = vector.broadcast %1 : vector<32x1xf32> to vector<32x128xf32>
    %49 = arith.subf %47, %48 : vector<32x128xf32>
    %50 = arith.mulf %49, %49 : vector<32x128xf32>
    %51 = vector.extract_strided_slice %44 {offsets = [10, 0], sizes = [1, 128], strides = [1, 1]} : vector<30x128xf32> to vector<1x128xf32>
    %52 = vector.broadcast %51 : vector<1x128xf32> to vector<32x128xf32>
    %53 = vector.broadcast %2 : vector<32x1xf32> to vector<32x128xf32>
    %54 = arith.subf %52, %53 : vector<32x128xf32>
    %55 = arith.mulf %54, %54 : vector<32x128xf32>
    %56 = arith.addf %50, %55 : vector<32x128xf32>
    %57 = vector.extract_strided_slice %44 {offsets = [20, 0], sizes = [1, 128], strides = [1, 1]} : vector<30x128xf32> to vector<1x128xf32>
    %58 = vector.broadcast %57 : vector<1x128xf32> to vector<32x128xf32>
    %59 = vector.broadcast %3 : vector<32x1xf32> to vector<32x128xf32>
    %60 = arith.subf %58, %59 : vector<32x128xf32>
    %61 = arith.mulf %60, %60 : vector<32x128xf32>
    %62 = arith.addf %56, %61 : vector<32x128xf32>
    %63 = math.sqrt %62 : vector<32x128xf32>
    %cst_19 = arith.constant 9.52380943 : f32
    %64 = vector.broadcast %cst_19 : f32 to vector<32x128xf32>
    %65 = arith.mulf %63, %64 : vector<32x128xf32>
    %cst_20 = arith.constant 1.000000e+00 : f32
    %66 = vector.broadcast %cst_20 : f32 to vector<32x128xf32>
    %67 = arith.subf %66, %65 : vector<32x128xf32>
    %cst_21 = arith.constant 0.000000e+00 : f32
    %68 = vector.broadcast %cst_21 : f32 to vector<32x128xf32>
    %69 = arith.maximumf %68, %67 : vector<32x128xf32>
    %70 = arith.addf %45, %69 : vector<32x128xf32>
    %71 = vector.extract_strided_slice %44 {offsets = [1, 0], sizes = [1, 128], strides = [1, 1]} : vector<30x128xf32> to vector<1x128xf32>
    %72 = vector.broadcast %71 : vector<1x128xf32> to vector<32x128xf32>
    %73 = vector.broadcast %1 : vector<32x1xf32> to vector<32x128xf32>
    %74 = arith.subf %72, %73 : vector<32x128xf32>
    %75 = arith.mulf %74, %74 : vector<32x128xf32>
    %76 = vector.extract_strided_slice %44 {offsets = [11, 0], sizes = [1, 128], strides = [1, 1]} : vector<30x128xf32> to vector<1x128xf32>
    %77 = vector.broadcast %76 : vector<1x128xf32> to vector<32x128xf32>
    %78 = vector.broadcast %2 : vector<32x1xf32> to vector<32x128xf32>
    %79 = arith.subf %77, %78 : vector<32x128xf32>
    %80 = arith.mulf %79, %79 : vector<32x128xf32>
    %81 = arith.addf %75, %80 : vector<32x128xf32>
    %82 = vector.extract_strided_slice %44 {offsets = [21, 0], sizes = [1, 128], strides = [1, 1]} : vector<30x128xf32> to vector<1x128xf32>
    %83 = vector.broadcast %82 : vector<1x128xf32> to vector<32x128xf32>
    %84 = vector.broadcast %3 : vector<32x1xf32> to vector<32x128xf32>
    %85 = arith.subf %83, %84 : vector<32x128xf32>
    %86 = arith.mulf %85, %85 : vector<32x128xf32>
    %87 = arith.addf %81, %86 : vector<32x128xf32>
    %88 = math.sqrt %87 : vector<32x128xf32>
    %cst_22 = arith.constant 9.52380943 : f32
    %89 = vector.broadcast %cst_22 : f32 to vector<32x128xf32>
    %90 = arith.mulf %88, %89 : vector<32x128xf32>
    %cst_23 = arith.constant 1.000000e+00 : f32
    %91 = vector.broadcast %cst_23 : f32 to vector<32x128xf32>
    %92 = arith.subf %91, %90 : vector<32x128xf32>
    %cst_24 = arith.constant 0.000000e+00 : f32
    %93 = vector.broadcast %cst_24 : f32 to vector<32x128xf32>
    %94 = arith.maximumf %93, %92 : vector<32x128xf32>
    %95 = arith.addf %70, %94 : vector<32x128xf32>
    %96 = vector.extract_strided_slice %44 {offsets = [2, 0], sizes = [1, 128], strides = [1, 1]} : vector<30x128xf32> to vector<1x128xf32>
    %97 = vector.broadcast %96 : vector<1x128xf32> to vector<32x128xf32>
    %98 = vector.broadcast %1 : vector<32x1xf32> to vector<32x128xf32>
    %99 = arith.subf %97, %98 : vector<32x128xf32>
    %100 = arith.mulf %99, %99 : vector<32x128xf32>
    %101 = vector.extract_strided_slice %44 {offsets = [12, 0], sizes = [1, 128], strides = [1, 1]} : vector<30x128xf32> to vector<1x128xf32>
    %102 = vector.broadcast %101 : vector<1x128xf32> to vector<32x128xf32>
    %103 = vector.broadcast %2 : vector<32x1xf32> to vector<32x128xf32>
    %104 = arith.subf %102, %103 : vector<32x128xf32>
    %105 = arith.mulf %104, %104 : vector<32x128xf32>
    %106 = arith.addf %100, %105 : vector<32x128xf32>
    %107 = vector.extract_strided_slice %44 {offsets = [22, 0], sizes = [1, 128], strides = [1, 1]} : vector<30x128xf32> to vector<1x128xf32>
    %108 = vector.broadcast %107 : vector<1x128xf32> to vector<32x128xf32>
    %109 = vector.broadcast %3 : vector<32x1xf32> to vector<32x128xf32>
    %110 = arith.subf %108, %109 : vector<32x128xf32>
    %111 = arith.mulf %110, %110 : vector<32x128xf32>
    %112 = arith.addf %106, %111 : vector<32x128xf32>
    %113 = math.sqrt %112 : vector<32x128xf32>
    %cst_25 = arith.constant 9.52380943 : f32
    %114 = vector.broadcast %cst_25 : f32 to vector<32x128xf32>
    %115 = arith.mulf %113, %114 : vector<32x128xf32>
    %cst_26 = arith.constant 1.000000e+00 : f32
    %116 = vector.broadcast %cst_26 : f32 to vector<32x128xf32>
    %117 = arith.subf %116, %115 : vector<32x128xf32>
    %cst_27 = arith.constant 0.000000e+00 : f32
    %118 = vector.broadcast %cst_27 : f32 to vector<32x128xf32>
    %119 = arith.maximumf %118, %117 : vector<32x128xf32>
    %120 = arith.addf %95, %119 : vector<32x128xf32>
    %121 = vector.extract_strided_slice %44 {offsets = [3, 0], sizes = [1, 128], strides = [1, 1]} : vector<30x128xf32> to vector<1x128xf32>
    %122 = vector.broadcast %121 : vector<1x128xf32> to vector<32x128xf32>
    %123 = vector.broadcast %1 : vector<32x1xf32> to vector<32x128xf32>
    %124 = arith.subf %122, %123 : vector<32x128xf32>
    %125 = arith.mulf %124, %124 : vector<32x128xf32>
    %126 = vector.extract_strided_slice %44 {offsets = [13, 0], sizes = [1, 128], strides = [1, 1]} : vector<30x128xf32> to vector<1x128xf32>
    %127 = vector.broadcast %126 : vector<1x128xf32> to vector<32x128xf32>
    %128 = vector.broadcast %2 : vector<32x1xf32> to vector<32x128xf32>
    %129 = arith.subf %127, %128 : vector<32x128xf32>
    %130 = arith.mulf %129, %129 : vector<32x128xf32>
    %131 = arith.addf %125, %130 : vector<32x128xf32>
    %132 = vector.extract_strided_slice %44 {offsets = [23, 0], sizes = [1, 128], strides = [1, 1]} : vector<30x128xf32> to vector<1x128xf32>
    %133 = vector.broadcast %132 : vector<1x128xf32> to vector<32x128xf32>
    %134 = vector.broadcast %3 : vector<32x1xf32> to vector<32x128xf32>
    %135 = arith.subf %133, %134 : vector<32x128xf32>
    %136 = arith.mulf %135, %135 : vector<32x128xf32>
    %137 = arith.addf %131, %136 : vector<32x128xf32>
    %138 = math.sqrt %137 : vector<32x128xf32>
    %cst_28 = arith.constant 9.52380943 : f32
    %139 = vector.broadcast %cst_28 : f32 to vector<32x128xf32>
    %140 = arith.mulf %138, %139 : vector<32x128xf32>
    %cst_29 = arith.constant 1.000000e+00 : f32
    %141 = vector.broadcast %cst_29 : f32 to vector<32x128xf32>
    %142 = arith.subf %141, %140 : vector<32x128xf32>
    %cst_30 = arith.constant 0.000000e+00 : f32
    %143 = vector.broadcast %cst_30 : f32 to vector<32x128xf32>
    %144 = arith.maximumf %143, %142 : vector<32x128xf32>
    %145 = arith.addf %120, %144 : vector<32x128xf32>
    %146 = vector.extract_strided_slice %44 {offsets = [4, 0], sizes = [1, 128], strides = [1, 1]} : vector<30x128xf32> to vector<1x128xf32>
    %147 = vector.broadcast %146 : vector<1x128xf32> to vector<32x128xf32>
    %148 = vector.broadcast %1 : vector<32x1xf32> to vector<32x128xf32>
    %149 = arith.subf %147, %148 : vector<32x128xf32>
    %150 = arith.mulf %149, %149 : vector<32x128xf32>
    %151 = vector.extract_strided_slice %44 {offsets = [14, 0], sizes = [1, 128], strides = [1, 1]} : vector<30x128xf32> to vector<1x128xf32>
    %152 = vector.broadcast %151 : vector<1x128xf32> to vector<32x128xf32>
    %153 = vector.broadcast %2 : vector<32x1xf32> to vector<32x128xf32>
    %154 = arith.subf %152, %153 : vector<32x128xf32>
    %155 = arith.mulf %154, %154 : vector<32x128xf32>
    %156 = arith.addf %150, %155 : vector<32x128xf32>
    %157 = vector.extract_strided_slice %44 {offsets = [24, 0], sizes = [1, 128], strides = [1, 1]} : vector<30x128xf32> to vector<1x128xf32>
    %158 = vector.broadcast %157 : vector<1x128xf32> to vector<32x128xf32>
    %159 = vector.broadcast %3 : vector<32x1xf32> to vector<32x128xf32>
    %160 = arith.subf %158, %159 : vector<32x128xf32>
    %161 = arith.mulf %160, %160 : vector<32x128xf32>
    %162 = arith.addf %156, %161 : vector<32x128xf32>
    %163 = math.sqrt %162 : vector<32x128xf32>
    %cst_31 = arith.constant 9.52380943 : f32
    %164 = vector.broadcast %cst_31 : f32 to vector<32x128xf32>
    %165 = arith.mulf %163, %164 : vector<32x128xf32>
    %cst_32 = arith.constant 1.000000e+00 : f32
    %166 = vector.broadcast %cst_32 : f32 to vector<32x128xf32>
    %167 = arith.subf %166, %165 : vector<32x128xf32>
    %cst_33 = arith.constant 0.000000e+00 : f32
    %168 = vector.broadcast %cst_33 : f32 to vector<32x128xf32>
    %169 = arith.maximumf %168, %167 : vector<32x128xf32>
    %170 = arith.addf %145, %169 : vector<32x128xf32>
    %171 = vector.extract_strided_slice %44 {offsets = [5, 0], sizes = [1, 128], strides = [1, 1]} : vector<30x128xf32> to vector<1x128xf32>
    %172 = vector.broadcast %171 : vector<1x128xf32> to vector<32x128xf32>
    %173 = vector.broadcast %1 : vector<32x1xf32> to vector<32x128xf32>
    %174 = arith.subf %172, %173 : vector<32x128xf32>
    %175 = arith.mulf %174, %174 : vector<32x128xf32>
    %176 = vector.extract_strided_slice %44 {offsets = [15, 0], sizes = [1, 128], strides = [1, 1]} : vector<30x128xf32> to vector<1x128xf32>
    %177 = vector.broadcast %176 : vector<1x128xf32> to vector<32x128xf32>
    %178 = vector.broadcast %2 : vector<32x1xf32> to vector<32x128xf32>
    %179 = arith.subf %177, %178 : vector<32x128xf32>
    %180 = arith.mulf %179, %179 : vector<32x128xf32>
    %181 = arith.addf %175, %180 : vector<32x128xf32>
    %182 = vector.extract_strided_slice %44 {offsets = [25, 0], sizes = [1, 128], strides = [1, 1]} : vector<30x128xf32> to vector<1x128xf32>
    %183 = vector.broadcast %182 : vector<1x128xf32> to vector<32x128xf32>
    %184 = vector.broadcast %3 : vector<32x1xf32> to vector<32x128xf32>
    %185 = arith.subf %183, %184 : vector<32x128xf32>
    %186 = arith.mulf %185, %185 : vector<32x128xf32>
    %187 = arith.addf %181, %186 : vector<32x128xf32>
    %188 = math.sqrt %187 : vector<32x128xf32>
    %cst_34 = arith.constant 9.52380943 : f32
    %189 = vector.broadcast %cst_34 : f32 to vector<32x128xf32>
    %190 = arith.mulf %188, %189 : vector<32x128xf32>
    %cst_35 = arith.constant 1.000000e+00 : f32
    %191 = vector.broadcast %cst_35 : f32 to vector<32x128xf32>
    %192 = arith.subf %191, %190 : vector<32x128xf32>
    %cst_36 = arith.constant 0.000000e+00 : f32
    %193 = vector.broadcast %cst_36 : f32 to vector<32x128xf32>
    %194 = arith.maximumf %193, %192 : vector<32x128xf32>
    %195 = arith.addf %170, %194 : vector<32x128xf32>
    %196 = vector.extract_strided_slice %44 {offsets = [6, 0], sizes = [1, 128], strides = [1, 1]} : vector<30x128xf32> to vector<1x128xf32>
    %197 = vector.broadcast %196 : vector<1x128xf32> to vector<32x128xf32>
    %198 = vector.broadcast %1 : vector<32x1xf32> to vector<32x128xf32>
    %199 = arith.subf %197, %198 : vector<32x128xf32>
    %200 = arith.mulf %199, %199 : vector<32x128xf32>
    %201 = vector.extract_strided_slice %44 {offsets = [16, 0], sizes = [1, 128], strides = [1, 1]} : vector<30x128xf32> to vector<1x128xf32>
    %202 = vector.broadcast %201 : vector<1x128xf32> to vector<32x128xf32>
    %203 = vector.broadcast %2 : vector<32x1xf32> to vector<32x128xf32>
    %204 = arith.subf %202, %203 : vector<32x128xf32>
    %205 = arith.mulf %204, %204 : vector<32x128xf32>
    %206 = arith.addf %200, %205 : vector<32x128xf32>
    %207 = vector.extract_strided_slice %44 {offsets = [26, 0], sizes = [1, 128], strides = [1, 1]} : vector<30x128xf32> to vector<1x128xf32>
    %208 = vector.broadcast %207 : vector<1x128xf32> to vector<32x128xf32>
    %209 = vector.broadcast %3 : vector<32x1xf32> to vector<32x128xf32>
    %210 = arith.subf %208, %209 : vector<32x128xf32>
    %211 = arith.mulf %210, %210 : vector<32x128xf32>
    %212 = arith.addf %206, %211 : vector<32x128xf32>
    %213 = math.sqrt %212 : vector<32x128xf32>
    %cst_37 = arith.constant 9.52380943 : f32
    %214 = vector.broadcast %cst_37 : f32 to vector<32x128xf32>
    %215 = arith.mulf %213, %214 : vector<32x128xf32>
    %cst_38 = arith.constant 1.000000e+00 : f32
    %216 = vector.broadcast %cst_38 : f32 to vector<32x128xf32>
    %217 = arith.subf %216, %215 : vector<32x128xf32>
    %cst_39 = arith.constant 0.000000e+00 : f32
    %218 = vector.broadcast %cst_39 : f32 to vector<32x128xf32>
    %219 = arith.maximumf %218, %217 : vector<32x128xf32>
    %220 = arith.addf %195, %219 : vector<32x128xf32>
    %221 = vector.extract_strided_slice %44 {offsets = [7, 0], sizes = [1, 128], strides = [1, 1]} : vector<30x128xf32> to vector<1x128xf32>
    %222 = vector.broadcast %221 : vector<1x128xf32> to vector<32x128xf32>
    %223 = vector.broadcast %1 : vector<32x1xf32> to vector<32x128xf32>
    %224 = arith.subf %222, %223 : vector<32x128xf32>
    %225 = arith.mulf %224, %224 : vector<32x128xf32>
    %226 = vector.extract_strided_slice %44 {offsets = [17, 0], sizes = [1, 128], strides = [1, 1]} : vector<30x128xf32> to vector<1x128xf32>
    %227 = vector.broadcast %226 : vector<1x128xf32> to vector<32x128xf32>
    %228 = vector.broadcast %2 : vector<32x1xf32> to vector<32x128xf32>
    %229 = arith.subf %227, %228 : vector<32x128xf32>
    %230 = arith.mulf %229, %229 : vector<32x128xf32>
    %231 = arith.addf %225, %230 : vector<32x128xf32>
    %232 = vector.extract_strided_slice %44 {offsets = [27, 0], sizes = [1, 128], strides = [1, 1]} : vector<30x128xf32> to vector<1x128xf32>
    %233 = vector.broadcast %232 : vector<1x128xf32> to vector<32x128xf32>
    %234 = vector.broadcast %3 : vector<32x1xf32> to vector<32x128xf32>
    %235 = arith.subf %233, %234 : vector<32x128xf32>
    %236 = arith.mulf %235, %235 : vector<32x128xf32>
    %237 = arith.addf %231, %236 : vector<32x128xf32>
    %238 = math.sqrt %237 : vector<32x128xf32>
    %cst_40 = arith.constant 9.52380943 : f32
    %239 = vector.broadcast %cst_40 : f32 to vector<32x128xf32>
    %240 = arith.mulf %238, %239 : vector<32x128xf32>
    %cst_41 = arith.constant 1.000000e+00 : f32
    %241 = vector.broadcast %cst_41 : f32 to vector<32x128xf32>
    %242 = arith.subf %241, %240 : vector<32x128xf32>
    %cst_42 = arith.constant 0.000000e+00 : f32
    %243 = vector.broadcast %cst_42 : f32 to vector<32x128xf32>
    %244 = arith.maximumf %243, %242 : vector<32x128xf32>
    %245 = arith.addf %220, %244 : vector<32x128xf32>
    %246 = vector.extract_strided_slice %44 {offsets = [8, 0], sizes = [1, 128], strides = [1, 1]} : vector<30x128xf32> to vector<1x128xf32>
    %247 = vector.broadcast %246 : vector<1x128xf32> to vector<32x128xf32>
    %248 = vector.broadcast %1 : vector<32x1xf32> to vector<32x128xf32>
    %249 = arith.subf %247, %248 : vector<32x128xf32>
    %250 = arith.mulf %249, %249 : vector<32x128xf32>
    %251 = vector.extract_strided_slice %44 {offsets = [18, 0], sizes = [1, 128], strides = [1, 1]} : vector<30x128xf32> to vector<1x128xf32>
    %252 = vector.broadcast %251 : vector<1x128xf32> to vector<32x128xf32>
    %253 = vector.broadcast %2 : vector<32x1xf32> to vector<32x128xf32>
    %254 = arith.subf %252, %253 : vector<32x128xf32>
    %255 = arith.mulf %254, %254 : vector<32x128xf32>
    %256 = arith.addf %250, %255 : vector<32x128xf32>
    %257 = vector.extract_strided_slice %44 {offsets = [28, 0], sizes = [1, 128], strides = [1, 1]} : vector<30x128xf32> to vector<1x128xf32>
    %258 = vector.broadcast %257 : vector<1x128xf32> to vector<32x128xf32>
    %259 = vector.broadcast %3 : vector<32x1xf32> to vector<32x128xf32>
    %260 = arith.subf %258, %259 : vector<32x128xf32>
    %261 = arith.mulf %260, %260 : vector<32x128xf32>
    %262 = arith.addf %256, %261 : vector<32x128xf32>
    %263 = math.sqrt %262 : vector<32x128xf32>
    %cst_43 = arith.constant 9.52380943 : f32
    %264 = vector.broadcast %cst_43 : f32 to vector<32x128xf32>
    %265 = arith.mulf %263, %264 : vector<32x128xf32>
    %cst_44 = arith.constant 1.000000e+00 : f32
    %266 = vector.broadcast %cst_44 : f32 to vector<32x128xf32>
    %267 = arith.subf %266, %265 : vector<32x128xf32>
    %cst_45 = arith.constant 0.000000e+00 : f32
    %268 = vector.broadcast %cst_45 : f32 to vector<32x128xf32>
    %269 = arith.maximumf %268, %267 : vector<32x128xf32>
    %270 = arith.addf %245, %269 : vector<32x128xf32>
    %271 = vector.extract_strided_slice %44 {offsets = [9, 0], sizes = [1, 128], strides = [1, 1]} : vector<30x128xf32> to vector<1x128xf32>
    %272 = vector.broadcast %271 : vector<1x128xf32> to vector<32x128xf32>
    %273 = vector.broadcast %1 : vector<32x1xf32> to vector<32x128xf32>
    %274 = arith.subf %272, %273 : vector<32x128xf32>
    %275 = arith.mulf %274, %274 : vector<32x128xf32>
    %276 = vector.extract_strided_slice %44 {offsets = [19, 0], sizes = [1, 128], strides = [1, 1]} : vector<30x128xf32> to vector<1x128xf32>
    %277 = vector.broadcast %276 : vector<1x128xf32> to vector<32x128xf32>
    %278 = vector.broadcast %2 : vector<32x1xf32> to vector<32x128xf32>
    %279 = arith.subf %277, %278 : vector<32x128xf32>
    %280 = arith.mulf %279, %279 : vector<32x128xf32>
    %281 = arith.addf %275, %280 : vector<32x128xf32>
    %282 = vector.extract_strided_slice %44 {offsets = [29, 0], sizes = [1, 128], strides = [1, 1]} : vector<30x128xf32> to vector<1x128xf32>
    %283 = vector.broadcast %282 : vector<1x128xf32> to vector<32x128xf32>
    %284 = vector.broadcast %3 : vector<32x1xf32> to vector<32x128xf32>
    %285 = arith.subf %283, %284 : vector<32x128xf32>
    %286 = arith.mulf %285, %285 : vector<32x128xf32>
    %287 = arith.addf %281, %286 : vector<32x128xf32>
    %288 = math.sqrt %287 : vector<32x128xf32>
    %cst_46 = arith.constant 9.52380943 : f32
    %289 = vector.broadcast %cst_46 : f32 to vector<32x128xf32>
    %290 = arith.mulf %288, %289 : vector<32x128xf32>
    %cst_47 = arith.constant 1.000000e+00 : f32
    %291 = vector.broadcast %cst_47 : f32 to vector<32x128xf32>
    %292 = arith.subf %291, %290 : vector<32x128xf32>
    %cst_48 = arith.constant 0.000000e+00 : f32
    %293 = vector.broadcast %cst_48 : f32 to vector<32x128xf32>
    %294 = arith.maximumf %293, %292 : vector<32x128xf32>
    %295 = arith.addf %270, %294 : vector<32x128xf32>
    %296 = vector.broadcast %42 : vector<1x128xf32> to vector<32x128xf32>
    %297 = arith.mulf %295, %296 : vector<32x128xf32>
    %cst_49 = arith.constant dense<0.000000e+00> : vector<32xf32>
    %298 = vector.multi_reduction <add>, %297, %cst_49 [1] : vector<32x128xf32> to vector<32xf32>
    %299 = vector.shape_cast %298 : vector<32xf32> to vector<32x1xf32>
    %300 = vector.broadcast %299 : vector<32x1xf32> to vector<32x128xf32>
    %301 = arith.mulf %300, %4 : vector<32x128xf32>
    %cst_50 = arith.constant dense<0.000000e+00> : vector<128xf32>
    %302 = vector.multi_reduction <add>, %301, %cst_50 [0] : vector<32x128xf32> to vector<128xf32>
    %303 = vector.shape_cast %302 : vector<128xf32> to vector<1x128xf32>
    %304 = arith.addf %303, %5 : vector<1x128xf32>
    %c0_51 = arith.constant 0 : index
    %c0_52 = arith.constant 0 : index
    %c0_53 = arith.constant 0 : index
    %305 = vector.load %arg7[%c0_51, %c0_52, %c0_53] : memref<1x1x128xf32, #tpu.memory_space<vmem>>, vector<1x1x128xf32>
    %306 = vector.shape_cast %305 : vector<1x1x128xf32> to vector<1x128xf32>
    %307 = vector.shape_cast %304 : vector<1x128xf32> to vector<1x1x128xf32>
    tpu.vector_store %arg7[%c0_51, %c0_52, %c0_53], %307 {strides = array<i32>} : memref<1x1x128xf32, #tpu.memory_space<vmem>>, vector<1x1x128xf32>,
    return
  }
  func.func @transform_0(%arg0: i32) -> (i32, i32, i32) {
    %c0_i32 = arith.constant 0 : i32
    %c0_i32_0 = arith.constant 0 : i32
    %c0_i32_1 = arith.constant 0 : i32
    return %arg0, %c0_i32, %c0_i32_0 : i32, i32, i32
  }
  func.func @transform_1(%arg0: i32) -> (i32, i32, i32) {
    %c0_i32 = arith.constant 0 : i32
    %c0_i32_0 = arith.constant 0 : i32
    %c0_i32_1 = arith.constant 0 : i32
    return %arg0, %c0_i32, %c0_i32_0 : i32, i32, i32
  }
  func.func @transform_2(%arg0: i32) -> (i32, i32, i32) {
    %c0_i32 = arith.constant 0 : i32
    %c0_i32_0 = arith.constant 0 : i32
    %c0_i32_1 = arith.constant 0 : i32
    return %arg0, %c0_i32, %c0_i32_0 : i32, i32, i32
  }
  func.func @transform_3(%arg0: i32) -> (i32, i32) {
    %c0_i32 = arith.constant 0 : i32
    %c0_i32_0 = arith.constant 0 : i32
    %c0_i32_1 = arith.constant 0 : i32
    return %c0_i32, %c0_i32_0 : i32, i32
  }
  func.func @transform_4(%arg0: i32) -> (i32, i32) {
    %c0_i32 = arith.constant 0 : i32
    %c0_i32_0 = arith.constant 0 : i32
    %c0_i32_1 = arith.constant 0 : i32
    return %c0_i32, %c0_i32_0 : i32, i32
  }
  func.func @transform_5(%arg0: i32) -> (i32, i32) {
    %c0_i32 = arith.constant 0 : i32
    %c0_i32_0 = arith.constant 0 : i32
    %c0_i32_1 = arith.constant 0 : i32
    return %c0_i32, %c0_i32_0 : i32, i32
  }
  func.func @transform_6(%arg0: i32) -> (i32, i32, i32) {
    %c0_i32 = arith.constant 0 : i32
    %c0_i32_0 = arith.constant 0 : i32
    %c0_i32_1 = arith.constant 0 : i32
    return %arg0, %c0_i32, %c0_i32_0 : i32, i32, i32
  }
}

</mosaic_0001>

<llo_original>
// kernel: neg.1
$region0: #{neg.1}
  #allocation0 [shape = 's32[1]{0}', space=sflag, size = 0x4, scoped, tag = 'scoped memory for neg.1']
  %s0 = inlined_call_operand.vmem [shape: f32[2,128,128], index: 0, kind: input, shape index: {}]
  %s1 = inlined_call_operand.vmem [shape: f32[2,128,128], index: 1, kind: output, shape index: {}]
  %v2 = vld [vmem:[%s0] sm:$0xff]
  %3 = xla_tuple %v2
  %4 = xla_tuple %3
  %v5 = vxor.u32 %v2, 2147483648
  %6 = xla_tuple %v5
  %7 = vst [vmem:[%s1] sm:$0xff] %v5
  %s8 = scalar_lea.vmem %s0, 128
  %v9 = vld [vmem:[%s8] sm:$0xff]
  %10 = xla_tuple %v9
  %11 = xla_tuple %10
  %v12 = vxor.u32 %v9, 2147483648
  %13 = xla_tuple %v12
  %s14 = scalar_lea.vmem %s1, 128
  %15 = vst [vmem:[%s14] sm:$0xff] %v12
  %s16 = scalar_lea.vmem %s0, 8
  %v17 = vld [vmem:[%s16] sm:$0xff]
  %18 = xla_tuple %v17
  %19 = xla_tuple %18
  %v20 = vxor.u32 %v17, 2147483648
  %21 = xla_tuple %v20
  %s22 = scalar_lea.vmem %s1, 8
  %23 = vst [vmem:[%s22] sm:$0xff] %v20
  %s24 = scalar_lea.vmem %s0, 136
  %v25 = vld [vmem:[%s24] sm:$0xff]
  %26 = xla_tuple %v25
  %27 = xla_tuple %26
  %v28 = vxor.u32 %v25, 2147483648
  %29 = xla_tuple %v28
  %s30 = scalar_lea.vmem %s1, 136
  %31 = vst [vmem:[%s30] sm:$0xff] %v28
  %s32 = scalar_lea.vmem %s0, 16
  %v33 = vld [vmem:[%s32] sm:$0xff]
  %34 = xla_tuple %v33
  %35 = xla_tuple %34
  %v36 = vxor.u32 %v33, 2147483648
  %37 = xla_tuple %v36
  %s38 = scalar_lea.vmem %s1, 16
  %39 = vst [vmem:[%s38] sm:$0xff] %v36
  %s40 = scalar_lea.vmem %s0, 144
  %v41 = vld [vmem:[%s40] sm:$0xff]
  %42 = xla_tuple %v41
  %43 = xla_tuple %42
  %v44 = vxor.u32 %v41, 2147483648
  %45 = xla_tuple %v44
  %s46 = scalar_lea.vmem %s1, 144
  %47 = vst [vmem:[%s46] sm:$0xff] %v44
  %s48 = scalar_lea.vmem %s0, 24
  %v49 = vld [vmem:[%s48] sm:$0xff]
  %50 = xla_tuple %v49
  %51 = xla_tuple %50
  %v52 = vxor.u32 %v49, 2147483648
  %53 = xla_tuple %v52
  %s54 = scalar_lea.vmem %s1, 24
  %55 = vst [vmem:[%s54] sm:$0xff] %v52
  %s56 = scalar_lea.vmem %s0, 152
  %v57 = vld [vmem:[%s56] sm:$0xff]
  %58 = xla_tuple %v57
  %59 = xla_tuple %58
  %v60 = vxor.u32 %v57, 2147483648
  %61 = xla_tuple %v60
  %s62 = scalar_lea.vmem %s1, 152
  %63 = vst [vmem:[%s62] sm:$0xff] %v60
  %s64 = scalar_lea.vmem %s0, 32
  %v65 = vld [vmem:[%s64] sm:$0xff]
  %66 = xla_tuple %v65
  %67 = xla_tuple %66
  %v68 = vxor.u32 %v65, 2147483648
  %69 = xla_tuple %v68
  %s70 = scalar_lea.vmem %s1, 32
  %71 = vst [vmem:[%s70] sm:$0xff] %v68
  %s72 = scalar_lea.vmem %s0, 160
  %v73 = vld [vmem:[%s72] sm:$0xff]
  %74 = xla_tuple %v73
  %75 = xla_tuple %74
  %v76 = vxor.u32 %v73, 2147483648
  %77 = xla_tuple %v76
  %s78 = scalar_lea.vmem %s1, 160
  %79 = vst [vmem:[%s78] sm:$0xff] %v76
  %s80 = scalar_lea.vmem %s0, 40
  %v81 = vld [vmem:[%s80] sm:$0xff]
  %82 = xla_tuple %v81
  %83 = xla_tuple %82
  %v84 = vxor.u32 %v81, 2147483648
  %85 = xla_tuple %v84
  %s86 = scalar_lea.vmem %s1, 40
  %87 = vst [vmem:[%s86] sm:$0xff] %v84
  %s88 = scalar_lea.vmem %s0, 168
  %v89 = vld [vmem:[%s88] sm:$0xff]
  %90 = xla_tuple %v89
  %91 = xla_tuple %90
  %v92 = vxor.u32 %v89, 2147483648
  %93 = xla_tuple %v92
  %s94 = scalar_lea.vmem %s1, 168
  %95 = vst [vmem:[%s94] sm:$0xff] %v92
  %s96 = scalar_lea.vmem %s0, 48
  %v97 = vld [vmem:[%s96] sm:$0xff]
  %98 = xla_tuple %v97
  %99 = xla_tuple %98
  %v100 = vxor.u32 %v97, 2147483648
  %101 = xla_tuple %v100
  %s102 = scalar_lea.vmem %s1, 48
  %103 = vst [vmem:[%s102] sm:$0xff] %v100
  %s104 = scalar_lea.vmem %s0, 176
  %v105 = vld [vmem:[%s104] sm:$0xff]
  %106 = xla_tuple %v105
  %107 = xla_tuple %106
  %v108 = vxor.u32 %v105, 2147483648
  %109 = xla_tuple %v108
  %s110 = scalar_lea.vmem %s1, 176
  %111 = vst [vmem:[%s110] sm:$0xff] %v108
  %s112 = scalar_lea.vmem %s0, 56
  %v113 = vld [vmem:[%s112] sm:$0xff]
  %114 = xla_tuple %v113
  %115 = xla_tuple %114
  %v116 = vxor.u32 %v113, 2147483648
  %117 = xla_tuple %v116
  %s118 = scalar_lea.vmem %s1, 56
  %119 = vst [vmem:[%s118] sm:$0xff] %v116
  %s120 = scalar_lea.vmem %s0, 184
  %v121 = vld [vmem:[%s120] sm:$0xff]
  %122 = xla_tuple %v121
  %123 = xla_tuple %122
  %v124 = vxor.u32 %v121, 2147483648
  %125 = xla_tuple %v124
  %s126 = scalar_lea.vmem %s1, 184
  %127 = vst [vmem:[%s126] sm:$0xff] %v124
  %s128 = scalar_lea.vmem %s0, 64
  %v129 = vld [vmem:[%s128] sm:$0xff]
  %130 = xla_tuple %v129
  %131 = xla_tuple %130
  %v132 = vxor.u32 %v129, 2147483648
  %133 = xla_tuple %v132
  %s134 = scalar_lea.vmem %s1, 64
  %135 = vst [vmem:[%s134] sm:$0xff] %v132
  %s136 = scalar_lea.vmem %s0, 192
  %v137 = vld [vmem:[%s136] sm:$0xff]
  %138 = xla_tuple %v137
  %139 = xla_tuple %138
  %v140 = vxor.u32 %v137, 2147483648
  %141 = xla_tuple %v140
  %s142 = scalar_lea.vmem %s1, 192
  %143 = vst [vmem:[%s142] sm:$0xff] %v140
  %s144 = scalar_lea.vmem %s0, 72
  %v145 = vld [vmem:[%s144] sm:$0xff]
  %146 = xla_tuple %v145
  %147 = xla_tuple %146
  %v148 = vxor.u32 %v145, 2147483648
  %149 = xla_tuple %v148
  %s150 = scalar_lea.vmem %s1, 72
  %151 = vst [vmem:[%s150] sm:$0xff] %v148
  %s152 = scalar_lea.vmem %s0, 200
  %v153 = vld [vmem:[%s152] sm:$0xff]
  %154 = xla_tuple %v153
  %155 = xla_tuple %154
  %v156 = vxor.u32 %v153, 2147483648
  %157 = xla_tuple %v156
  %s158 = scalar_lea.vmem %s1, 200
  %159 = vst [vmem:[%s158] sm:$0xff] %v156
  %s160 = scalar_lea.vmem %s0, 80
  %v161 = vld [vmem:[%s160] sm:$0xff]
  %162 = xla_tuple %v161
  %163 = xla_tuple %162
  %v164 = vxor.u32 %v161, 2147483648
  %165 = xla_tuple %v164
  %s166 = scalar_lea.vmem %s1, 80
  %167 = vst [vmem:[%s166] sm:$0xff] %v164
  %s168 = scalar_lea.vmem %s0, 208
  %v169 = vld [vmem:[%s168] sm:$0xff]
  %170 = xla_tuple %v169
  %171 = xla_tuple %170
  %v172 = vxor.u32 %v169, 2147483648
  %173 = xla_tuple %v172
  %s174 = scalar_lea.vmem %s1, 208
  %175 = vst [vmem:[%s174] sm:$0xff] %v172
  %s176 = scalar_lea.vmem %s0, 88
  %v177 = vld [vmem:[%s176] sm:$0xff]
  %178 = xla_tuple %v177
  %179 = xla_tuple %178
  %v180 = vxor.u32 %v177, 2147483648
  %181 = xla_tuple %v180
  %s182 = scalar_lea.vmem %s1, 88
  %183 = vst [vmem:[%s182] sm:$0xff] %v180
  %s184 = scalar_lea.vmem %s0, 216
  %v185 = vld [vmem:[%s184] sm:$0xff]
  %186 = xla_tuple %v185
  %187 = xla_tuple %186
  %v188 = vxor.u32 %v185, 2147483648
  %189 = xla_tuple %v188
  %s190 = scalar_lea.vmem %s1, 216
  %191 = vst [vmem:[%s190] sm:$0xff] %v188
  %s192 = scalar_lea.vmem %s0, 96
  %v193 = vld [vmem:[%s192] sm:$0xff]
  %194 = xla_tuple %v193
  %195 = xla_tuple %194
  %v196 = vxor.u32 %v193, 2147483648
  %197 = xla_tuple %v196
  %s198 = scalar_lea.vmem %s1, 96
  %199 = vst [vmem:[%s198] sm:$0xff] %v196
  %s200 = scalar_lea.vmem %s0, 224
  %v201 = vld [vmem:[%s200] sm:$0xff]
  %202 = xla_tuple %v201
  %203 = xla_tuple %202
  %v204 = vxor.u32 %v201, 2147483648
  %205 = xla_tuple %v204
  %s206 = scalar_lea.vmem %s1, 224
  %207 = vst [vmem:[%s206] sm:$0xff] %v204
  %s208 = scalar_lea.vmem %s0, 104
  %v209 = vld [vmem:[%s208] sm:$0xff]
  %210 = xla_tuple %v209
  %211 = xla_tuple %210
  %v212 = vxor.u32 %v209, 2147483648
  %213 = xla_tuple %v212
  %s214 = scalar_lea.vmem %s1, 104
  %215 = vst [vmem:[%s214] sm:$0xff] %v212
  %s216 = scalar_lea.vmem %s0, 232
  %v217 = vld [vmem:[%s216] sm:$0xff]
  %218 = xla_tuple %v217
  %219 = xla_tuple %218
  %v220 = vxor.u32 %v217, 2147483648
  %221 = xla_tuple %v220
  %s222 = scalar_lea.vmem %s1, 232
  %223 = vst [vmem:[%s222] sm:$0xff] %v220
  %s224 = scalar_lea.vmem %s0, 112
  %v225 = vld [vmem:[%s224] sm:$0xff]
  %226 = xla_tuple %v225
  %227 = xla_tuple %226
  %v228 = vxor.u32 %v225, 2147483648
  %229 = xla_tuple %v228
  %s230 = scalar_lea.vmem %s1, 112
  %231 = vst [vmem:[%s230] sm:$0xff] %v228
  %s232 = scalar_lea.vmem %s0, 240
  %v233 = vld [vmem:[%s232] sm:$0xff]
  %234 = xla_tuple %v233
  %235 = xla_tuple %234
  %v236 = vxor.u32 %v233, 2147483648
  %237 = xla_tuple %v236
  %s238 = scalar_lea.vmem %s1, 240
  %239 = vst [vmem:[%s238] sm:$0xff] %v236
  %s240 = scalar_lea.vmem %s0, 120
  %v241 = vld [vmem:[%s240] sm:$0xff]
  %242 = xla_tuple %v241
  %243 = xla_tuple %242
  %v244 = vxor.u32 %v241, 2147483648
  %245 = xla_tuple %v244
  %s246 = scalar_lea.vmem %s1, 120
  %247 = vst [vmem:[%s246] sm:$0xff] %v244
  %s248 = scalar_lea.vmem %s0, 248
  %v249 = vld [vmem:[%s248] sm:$0xff]
  %250 = xla_tuple %v249
  %251 = xla_tuple %250
  %v252 = vxor.u32 %v249, 2147483648
  %253 = xla_tuple %v252
  %s254 = scalar_lea.vmem %s1, 248
  %255 = vst [vmem:[%s254] sm:$0xff] %v252

// kernel: model_forward.1
$region0: #{model_forward.1}
  #allocation0 [shape = 'u32[]', space=smem, size = 0x4, offset = 0x4, fixed_abs, tag = 'smem constant byte address 0x4 - core index']
  #allocation1 [shape = 'u32[144,128]{1,0:T(1,128)}', space=vmem, size = 0x12000, scoped, tag = 'internal scratch']
  %s0 = inlined_call_operand.vmem [shape: f32[2,128,3], index: 0, kind: input, shape index: {}]
  %s1 = inlined_call_operand.vmem [shape: f32[2,3,128], index: 1, kind: input, shape index: {}]
  %s2 = inlined_call_operand.vmem [shape: f32[2,30,128], index: 2, kind: input, shape index: {}]
  %s3 = inlined_call_operand.vmem [shape: f32[32,3], index: 3, kind: input, shape index: {}]
  %s4 = inlined_call_operand.vmem [shape: f32[32,128], index: 4, kind: input, shape index: {}]
  %s5 = inlined_call_operand.vmem [shape: f32[1,128], index: 5, kind: input, shape index: {}]
  %s6 = inlined_call_operand.hbm [shape: f32[2,1,128], index: 6, kind: output, shape index: {}]
  %s7 = sld [smem:[#allocation0]]
  $region57: #{model_forward.1} parent=0
    _
  %s9 = ssub.s32 1, %s7
  %s10 = scalar_select 0, %s9, %s7
  $region1: #{model_forward.1} parent=0
    #allocation2 [shape = 'u8[1024]{0}', space=vmem, size = 0x400, scoped, tag = 'output window, operand 0']
    #allocation3 [shape = 's32[2]{0}', space=sflag, size = 0x8, scoped, tag = 'scoped memory for model_forward.1']
    %11 = vsyncpa [#allocation3], 0
    %s12 = scalar_lea.sflag [#allocation3], 1
    %13 = vsyncpa %s12, 0
    loop: start=0, step=1, limit=4
    $region2: #{model_forward.1} parent=1 // loop_pre_header
      _
    $region3: #{model_forward.1} parent=1 // loop_header
      %s15 = sphi 0, %s19
      %p16 = scmp.ge.s32.totalorder %s15, 4
      %s25 = sphi 0, %s27
      %s28 = sphi 0, %s25
      %s29 = sphi 0, %s28
      %s45 = sphi 0, %s29
      %s51 = sphi 0, %s53
      %s54 = sphi 0, %s51
      %s55 = sphi 0, %s54
      %s71 = sphi 0, %s55
      %s77 = sphi 0, %s79
      %s80 = sphi 0, %s77
      %s81 = sphi 0, %s80
      %s97 = sphi 0, %s81
      %s101 = sphi 0, %s101
      %s103 = sphi 0, %s101
      %s104 = sphi 0, %s103
      %s118 = sphi 0, %s104
      %s122 = sphi 0, %s122
      %s124 = sphi 0, %s122
      %s125 = sphi 0, %s124
      %s139 = sphi 0, %s125
      %s143 = sphi 0, %s143
      %s145 = sphi 0, %s143
      %s146 = sphi 0, %s145
      %s160 = sphi 0, %s146
      %s166 = sphi 0, %s168
      %s169 = sphi 0, %s166
      %s170 = sphi 0, %s169
      %s186 = sphi 0, %s170
    $region4: #{model_forward.1} parent=1 // loop_header_branch
      %18 = sbr.rel (%p16) target = $region8
    $region5: #{model_forward.1} parent=1 // loop_body
      %s20 = ssub.s32 %s15, 1
      %s21 = ssub.s32 %s15, 2
      %s22 = sadd.s32 %s15, 1
      %s23 = ssub.s32 %s15, %s22
      %p24 = scmp.eq.s32.totalorder %s23, 0
      %s26 = sadd.s32 %s25, 1
      %s27 = scalar_select %p24, %s25, %s26
      %p30 = pneg %p24
      %p31 = scmp.eq.s32.totalorder %s15, 1
      %p32 = por %p30, %p31
      %p33 = scmp.ne.s32.totalorder %s25, %s28
      %p34 = scmp.eq.s32.totalorder %s15, 0
      %p35 = por %p33, %p34
      %p36 = scmp.ne.s32.totalorder %s25, %s28
      %p37 = scmp.eq.s32.totalorder %s20, 1
      %p38 = por %p36, %p37
      %p39 = scmp.ne.s32.totalorder %s28, %s29
      %p40 = scmp.eq.s32.totalorder %s20, 0
      %p41 = por %p39, %p40
      %p42 = scmp.ne.s32.totalorder %s28, %s29
      %p43 = scmp.eq.s32.totalorder %s21, 1
      %p44 = por %p42, %p43
      %p46 = scmp.ne.s32.totalorder %s29, %s45
      %p47 = scmp.eq.s32.totalorder %s21, 0
      %p48 = por %p46, %p47
      %s49 = ssub.s32 %s15, %s22
      %p50 = scmp.eq.s32.totalorder %s49, 0
      %s52 = sadd.s32 %s51, 1
      %s53 = scalar_select %p50, %s51, %s52
      %p56 = pneg %p50
      %p57 = scmp.eq.s32.totalorder %s15, 1
      %p58 = por %p56, %p57
      %p59 = scmp.ne.s32.totalorder %s51, %s54
      %p60 = scmp.eq.s32.totalorder %s15, 0
      %p61 = por %p59, %p60
      %p62 = scmp.ne.s32.totalorder %s51, %s54
      %p63 = scmp.eq.s32.totalorder %s20, 1
      %p64 = por %p62, %p63
      %p65 = scmp.ne.s32.totalorder %s54, %s55
      %p66 = scmp.eq.s32.totalorder %s20, 0
      %p67 = por %p65, %p66
      %p68 = scmp.ne.s32.totalorder %s54, %s55
      %p69 = scmp.eq.s32.totalorder %s21, 1
      %p70 = por %p68, %p69
      %p72 = scmp.ne.s32.totalorder %s55, %s71
      %p73 = scmp.eq.s32.totalorder %s21, 0
      %p74 = por %p72, %p73
      %s75 = ssub.s32 %s15, %s22
      %p76 = scmp.eq.s32.totalorder %s75, 0
      %s78 = sadd.s32 %s77, 1
      %s79 = scalar_select %p76, %s77, %s78
      %p82 = pneg %p76
      %p83 = scmp.eq.s32.totalorder %s15, 1
      %p84 = por %p82, %p83
      %p85 = scmp.ne.s32.totalorder %s77, %s80
      %p86 = scmp.eq.s32.totalorder %s15, 0
      %p87 = por %p85, %p86
      %p88 = scmp.ne.s32.totalorder %s77, %s80
      %p89 = scmp.eq.s32.totalorder %s20, 1
      %p90 = por %p88, %p89
      %p91 = scmp.ne.s32.totalorder %s80, %s81
      %p92 = scmp.eq.s32.totalorder %s20, 0
      %p93 = por %p91, %p92
      %p94 = scmp.ne.s32.totalorder %s80, %s81
      %p95 = scmp.eq.s32.totalorder %s21, 1
      %p96 = por %p94, %p95
      %p98 = scmp.ne.s32.totalorder %s81, %s97
      %p99 = scmp.eq.s32.totalorder %s21, 0
      %p100 = por %p98, %p99
      %s102 = sadd.s32 %s101, 1
      %p105 = scmp.eq.s32.totalorder %s15, 1
      %p106 = scmp.ne.s32.totalorder %s101, %s103
      %p107 = scmp.eq.s32.totalorder %s15, 0
      %p108 = por %p106, %p107
      %p109 = scmp.ne.s32.totalorder %s101, %s103
      %p110 = scmp.eq.s32.totalorder %s20, 1
      %p111 = por %p109, %p110
      %p112 = scmp.ne.s32.totalorder %s103, %s104
      %p113 = scmp.eq.s32.totalorder %s20, 0
      %p114 = por %p112, %p113
      %p115 = scmp.ne.s32.totalorder %s103, %s104
      %p116 = scmp.eq.s32.totalorder %s21, 1
      %p117 = por %p115, %p116
      %p119 = scmp.ne.s32.totalorder %s104, %s118
      %p120 = scmp.eq.s32.totalorder %s21, 0
      %p121 = por %p119, %p120
      %s123 = sadd.s32 %s122, 1
      %p126 = scmp.eq.s32.totalorder %s15, 1
      %p127 = scmp.ne.s32.totalorder %s122, %s124
      %p128 = scmp.eq.s32.totalorder %s15, 0
      %p129 = por %p127, %p128
      %p130 = scmp.ne.s32.totalorder %s122, %s124
      %p131 = scmp.eq.s32.totalorder %s20, 1
      %p132 = por %p130, %p131
      %p133 = scmp.ne.s32.totalorder %s124, %s125
      %p134 = scmp.eq.s32.totalorder %s20, 0
      %p135 = por %p133, %p134
      %p136 = scmp.ne.s32.totalorder %s124, %s125
      %p137 = scmp.eq.s32.totalorder %s21, 1
      %p138 = por %p136, %p137
      %p140 = scmp.ne.s32.totalorder %s125, %s139
      %p141 = scmp.eq.s32.totalorder %s21, 0
      %p142 = por %p140, %p141
      %s144 = sadd.s32 %s143, 1
      %p147 = scmp.eq.s32.totalorder %s15, 1
      %p148 = scmp.ne.s32.totalorder %s143, %s145
      %p149 = scmp.eq.s32.totalorder %s15, 0
      %p150 = por %p148, %p149
      %p151 = scmp.ne.s32.totalorder %s143, %s145
      %p152 = scmp.eq.s32.totalorder %s20, 1
      %p153 = por %p151, %p152
      %p154 = scmp.ne.s32.totalorder %s145, %s146
      %p155 = scmp.eq.s32.totalorder %s20, 0
      %p156 = por %p154, %p155
      %p157 = scmp.ne.s32.totalorder %s145, %s146
      %p158 = scmp.eq.s32.totalorder %s21, 1
      %p159 = por %p157, %p158
      %p161 = scmp.ne.s32.totalorder %s146, %s160
      %p162 = scmp.eq.s32.totalorder %s21, 0
      %p163 = por %p161, %p162
      %s164 = ssub.s32 %s15, %s22
      %p165 = scmp.eq.s32.totalorder %s164, 0
      %s167 = sadd.s32 %s166, 1
      %s168 = scalar_select %p165, %s166, %s167
      %p171 = pneg %p165
      %p172 = scmp.eq.s32.totalorder %s15, 1
      %p173 = por %p171, %p172
      %p174 = scmp.ne.s32.totalorder %s166, %s169
      %p175 = scmp.eq.s32.totalorder %s15, 0
      %p176 = por %p174, %p175
      %p177 = scmp.ne.s32.totalorder %s166, %s169
      %p178 = scmp.eq.s32.totalorder %s20, 1
      %p179 = por %p177, %p178
      %p180 = scmp.ne.s32.totalorder %s169, %s170
      %p181 = scmp.eq.s32.totalorder %s20, 0
      %p182 = por %p180, %p181
      %p183 = scmp.ne.s32.totalorder %s169, %s170
      %p184 = scmp.eq.s32.totalorder %s21, 1
      %p185 = por %p183, %p184
      %p187 = scmp.ne.s32.totalorder %s170, %s186
      %p188 = scmp.eq.s32.totalorder %s21, 0
      %p189 = por %p187, %p188
      %p190 = scmp.le.s32.totalorder 1, %s15
      %p191 = scmp.lt.s32.totalorder %s15, 3
      %p192 = pnand %p190, %p191
      %p193 = pneg %p192
      // Predicated region
      $region9: #{model_forward.1} parent=5 // pred_check
        _
      $region10: #{model_forward.1} parent=5 // pred_check_branch
        %195 = sbr.rel (%p192) target = $region12
      $region11: #{model_forward.1} parent=5 // pred_region
        %s196 = ssub.s32 %s15, 1
        // Predicated region
        $region13: #{model_forward.1} parent=11 // pred_check
          %p197 = pneg %p114
        $region14: #{model_forward.1} parent=11 // pred_check_branch
          %199 = sbr.rel (%p197) target = $region16
        $region15: #{model_forward.1} parent=11 // pred_region
          _
        $region16: #{model_forward.1} parent=11 // pred_fallthru
          _
        // Predicated region
        $region17: #{model_forward.1} parent=11 // pred_check
          %p200 = pneg %p135
        $region18: #{model_forward.1} parent=11 // pred_check_branch
          %202 = sbr.rel (%p200) target = $region20
        $region19: #{model_forward.1} parent=11 // pred_region
          _
        $region20: #{model_forward.1} parent=11 // pred_fallthru
          _
        // Predicated region
        $region21: #{model_forward.1} parent=11 // pred_check
          %p203 = pneg %p156
        $region22: #{model_forward.1} parent=11 // pred_check_branch
          %205 = sbr.rel (%p203) target = $region24
        $region23: #{model_forward.1} parent=11 // pred_region
          _
        $region24: #{model_forward.1} parent=11 // pred_fallthru
          _
      $region12: #{model_forward.1} parent=5 // pred_fallthru
        _
      %p206 = scmp.lt.s32.totalorder %s15, 2
      // Predicated region
      $region25: #{model_forward.1} parent=5 // pred_check
        %p207 = pneg %p206
      $region26: #{model_forward.1} parent=5 // pred_check_branch
        %209 = sbr.rel (%p207) target = $region28
      $region27: #{model_forward.1} parent=5 // pred_region
        // Predicated region
        $region29: #{model_forward.1} parent=27 // pred_check
          %p210 = pneg %p35
        $region30: #{model_forward.1} parent=27 // pred_check_branch
          %212 = sbr.rel (%p210) target = $region32
        $region31: #{model_forward.1} parent=27 // pred_region
          %p213 = scmp.lt.s32.totalorder %s15, 1
          %s214 = scalar_select %p213, %s15, 1
          %s215 = smul.addr %s214, 16
          %s216 = smul.addr %s215, 8
          %s217 = scalar_lea.vmem %s0, %s216
        $region32: #{model_forward.1} parent=27 // pred_fallthru
          _
        // Predicated region
        $region33: #{model_forward.1} parent=27 // pred_check
          %p218 = pneg %p61
        $region34: #{model_forward.1} parent=27 // pred_check_branch
          %220 = sbr.rel (%p218) target = $region36
        $region35: #{model_forward.1} parent=27 // pred_region
          %p221 = scmp.lt.s32.totalorder %s15, 1
          %s222 = scalar_select %p221, %s15, 1
          %s223 = smul.addr %s222, 4
          %s224 = scalar_lea.vmem %s1, %s223
        $region36: #{model_forward.1} parent=27 // pred_fallthru
          _
        // Predicated region
        $region37: #{model_forward.1} parent=27 // pred_check
          %p225 = pneg %p87
        $region38: #{model_forward.1} parent=27 // pred_check_branch
          %227 = sbr.rel (%p225) target = $region40
        $region39: #{model_forward.1} parent=27 // pred_region
          %p228 = scmp.lt.s32.totalorder %s15, 1
          %s229 = scalar_select %p228, %s15, 1
          %s230 = smul.addr %s229, 4
          %s231 = smul.addr %s230, 8
          %s232 = scalar_lea.vmem %s2, %s231
        $region40: #{model_forward.1} parent=27 // pred_fallthru
          _
      $region28: #{model_forward.1} parent=5 // pred_fallthru
        _
      %p233 = scmp.le.s32.totalorder 1, %s15
      %p234 = scmp.lt.s32.totalorder %s15, 3
      %p235 = pnand %p233, %p234
      %p236 = pneg %p235
      // Predicated region
      $region41: #{model_forward.1} parent=5 // pred_check
        _
      $region42: #{model_forward.1} parent=5 // pred_check_branch
        %238 = sbr.rel (%p235) target = $region44
      $region43: #{model_forward.1} parent=5 // pred_region
        %s239 = ssub.s32 %s15, 1
        %p240 = scmp.lt.s32.totalorder %s20, 1
        %s241 = scalar_select %p240, %s20, 1
        %s242 = smul.addr %s241, 16
        %s243 = smul.addr %s242, 8
        %s244 = scalar_lea.vmem %s0, %s243
        %p245 = pneg %p41
        %p246 = pneg %p38
        %p247 = scmp.lt.s32.totalorder %s20, 1
        %s248 = scalar_select %p247, %s20, 1
        %s249 = smul.addr %s248, 4
        %s250 = scalar_lea.vmem %s1, %s249
        %p251 = pneg %p67
        %p252 = pneg %p64
        %p253 = scmp.lt.s32.totalorder %s20, 1
        %s254 = scalar_select %p253, %s20, 1
        %s255 = smul.addr %s254, 4
        %s256 = smul.addr %s255, 8
        %s257 = scalar_lea.vmem %s2, %s256
        %p258 = pneg %p93
        %p259 = pneg %p90
        %p260 = pneg %p114
        %p261 = pneg %p111
        %p262 = pneg %p135
        %p263 = pneg %p132
        %p264 = pneg %p156
        %p265 = pneg %p153
        %p266 = pneg %p182
        %p267 = pneg %p179
        %s268 = sand.u32 %s169, 1
        %s269 = scalar_lea.sflag [#allocation3], %s268
        %s270 = sand.u32 %s169, 1
        %s271 = scalar_lea.vmem [#allocation2], %s270
        %p272 = scmp.lt.s32.totalorder %s20, 1
        %s273 = scalar_select %p272, %s20, 1
        %s274 = smul.addr %s273, 16
        %s275 = smul.addr %s274, 8
        %s276 = scalar_lea.vmem %s0, %s275
        %p277 = scmp.lt.s32.totalorder %s20, 1
        %s278 = scalar_select %p277, %s20, 1
        %s279 = smul.addr %s278, 4
        %s280 = scalar_lea.vmem %s1, %s279
        %p281 = scmp.lt.s32.totalorder %s20, 1
        %s282 = scalar_select %p281, %s20, 1
        %s283 = smul.addr %s282, 4
        %s284 = smul.addr %s283, 8
        %s285 = scalar_lea.vmem %s2, %s284
        %v286 = vld [vmem:[%s3] sm:$0xff]
        %v287 = vld [vmem:[%s3 + $0x8] sm:$0xff]
        %v288 = vld [vmem:[%s3 + $0x10] sm:$0xff]
        %v289 = vld [vmem:[%s3 + $0x18] sm:$0xff]
        %v290 = vld [vmem:[%s4] sm:$0xff]
        %v291 = vld [vmem:[%s4 + $0x8] sm:$0xff]
        %v292 = vld [vmem:[%s4 + $0x10] sm:$0xff]
        %v293 = vld [vmem:[%s4 + $0x18] sm:$0xff]
        %v294 = vld [vmem:[%s5] sm:$0x1]
        %v295 = vld [vmem:[%s276] sm:$0xff]
        %v296 = vld [vmem:[%s276 + $0x8] sm:$0xff]
        %v297 = vld [vmem:[%s276 + $0x10] sm:$0xff]
        %v298 = vld [vmem:[%s276 + $0x18] sm:$0xff]
        %v299 = vld [vmem:[%s276 + $0x20] sm:$0xff]
        %v300 = vld [vmem:[%s276 + $0x28] sm:$0xff]
        %v301 = vld [vmem:[%s276 + $0x30] sm:$0xff]
        %v302 = vld [vmem:[%s276 + $0x38] sm:$0xff]
        %v303 = vld [vmem:[%s276 + $0x40] sm:$0xff]
        %v304 = vld [vmem:[%s276 + $0x48] sm:$0xff]
        %v305 = vld [vmem:[%s276 + $0x50] sm:$0xff]
        %v306 = vld [vmem:[%s276 + $0x58] sm:$0xff]
        %v307 = vld [vmem:[%s276 + $0x60] sm:$0xff]
        %v308 = vld [vmem:[%s276 + $0x68] sm:$0xff]
        %v309 = vld [vmem:[%s276 + $0x70] sm:$0xff]
        %v310 = vld [vmem:[%s276 + $0x78] sm:$0xff]
        %v311 = vmul.f32 %v295, 10.0
        %v312 = vmul.f32 %v296, 10.0
        %v313 = vmul.f32 %v297, 10.0
        %v314 = vmul.f32 %v298, 10.0
        %v315 = vmul.f32 %v299, 10.0
        %v316 = vmul.f32 %v300, 10.0
        %v317 = vmul.f32 %v301, 10.0
        %v318 = vmul.f32 %v302, 10.0
        %v319 = vmul.f32 %v303, 10.0
        %v320 = vmul.f32 %v304, 10.0
        %v321 = vmul.f32 %v305, 10.0
        %v322 = vmul.f32 %v306, 10.0
        %v323 = vmul.f32 %v307, 10.0
        %v324 = vmul.f32 %v308, 10.0
        %v325 = vmul.f32 %v309, 10.0
        %v326 = vmul.f32 %v310, 10.0
        %v327 = vfloor.f32 %v311
        %v328 = vfloor.f32 %v312
        %v329 = vfloor.f32 %v313
        %v330 = vfloor.f32 %v314
        %v331 = vfloor.f32 %v315
        %v332 = vfloor.f32 %v316
        %v333 = vfloor.f32 %v317
        %v334 = vfloor.f32 %v318
        %v335 = vfloor.f32 %v319
        %v336 = vfloor.f32 %v320
        %v337 = vfloor.f32 %v321
        %v338 = vfloor.f32 %v322
        %v339 = vfloor.f32 %v323
        %v340 = vfloor.f32 %v324
        %v341 = vfloor.f32 %v325
        %v342 = vfloor.f32 %v326
        %v343 = vld [vmem:[%s280] sm:$0x7]
        %v344 = vmul.f32 %v343, 10.0
        %v345 = vfloor.f32 %v344
        %347 = vset.pattern.permute.xlu0 0
        %348 = vperm.xlu0 %347, %v327
        %v349 = vpop.permute.xlu0 %348
        %352 = vset.pattern.permute.xlu0 0
        %353 = vperm.xlu0 %352, %v328
        %v354 = vpop.permute.xlu0 %353
        %357 = vset.pattern.permute.xlu0 0
        %358 = vperm.xlu0 %357, %v329
        %v359 = vpop.permute.xlu0 %358
        %362 = vset.pattern.permute.xlu0 0
        %363 = vperm.xlu0 %362, %v330
        %v364 = vpop.permute.xlu0 %363
        %367 = vset.pattern.permute.xlu0 0
        %368 = vperm.xlu0 %367, %v331
        %v369 = vpop.permute.xlu0 %368
        %372 = vset.pattern.permute.xlu0 0
        %373 = vperm.xlu0 %372, %v332
        %v374 = vpop.permute.xlu0 %373
        %377 = vset.pattern.permute.xlu0 0
        %378 = vperm.xlu0 %377, %v333
        %v379 = vpop.permute.xlu0 %378
        %382 = vset.pattern.permute.xlu0 0
        %383 = vperm.xlu0 %382, %v334
        %v384 = vpop.permute.xlu0 %383
        %387 = vset.pattern.permute.xlu0 0
        %388 = vperm.xlu0 %387, %v335
        %v389 = vpop.permute.xlu0 %388
        %392 = vset.pattern.permute.xlu0 0
        %393 = vperm.xlu0 %392, %v336
        %v394 = vpop.permute.xlu0 %393
        %397 = vset.pattern.permute.xlu0 0
        %398 = vperm.xlu0 %397, %v337
        %v399 = vpop.permute.xlu0 %398
        %402 = vset.pattern.permute.xlu0 0
        %403 = vperm.xlu0 %402, %v338
        %v404 = vpop.permute.xlu0 %403
        %407 = vset.pattern.permute.xlu0 0
        %408 = vperm.xlu0 %407, %v339
        %v409 = vpop.permute.xlu0 %408
        %412 = vset.pattern.permute.xlu0 0
        %413 = vperm.xlu0 %412, %v340
        %v414 = vpop.permute.xlu0 %413
        %417 = vset.pattern.permute.xlu0 0
        %418 = vperm.xlu0 %417, %v341
        %v419 = vpop.permute.xlu0 %418
        %422 = vset.pattern.permute.xlu0 0
        %423 = vperm.xlu0 %422, %v342
        %v424 = vpop.permute.xlu0 %423
        %v426 = vlaneseq
        %v427 = vshrl.u32 %v426, 7
        %v428 = vsub.s32 0, %v427
        %v429 = vrot.slane %v345, %v428
        %vm430 = vcmp.eq.f32.partialorder %v349, %v429
        %vm431 = vcmp.eq.f32.partialorder %v354, %v429
        %vm432 = vcmp.eq.f32.partialorder %v359, %v429
        %vm433 = vcmp.eq.f32.partialorder %v364, %v429
        %vm434 = vcmp.eq.f32.partialorder %v369, %v429
        %vm435 = vcmp.eq.f32.partialorder %v374, %v429
        %vm436 = vcmp.eq.f32.partialorder %v379, %v429
        %vm437 = vcmp.eq.f32.partialorder %v384, %v429
        %vm438 = vcmp.eq.f32.partialorder %v389, %v429
        %vm439 = vcmp.eq.f32.partialorder %v394, %v429
        %vm440 = vcmp.eq.f32.partialorder %v399, %v429
        %vm441 = vcmp.eq.f32.partialorder %v404, %v429
        %vm442 = vcmp.eq.f32.partialorder %v409, %v429
        %vm443 = vcmp.eq.f32.partialorder %v414, %v429
        %vm444 = vcmp.eq.f32.partialorder %v419, %v429
        %vm445 = vcmp.eq.f32.partialorder %v424, %v429
        %446 = vset.pattern.permute.xlu0 1
        %447 = vperm.xlu0 %446, %v327
        %v448 = vpop.permute.xlu0 %447
        %450 = vset.pattern.permute.xlu0 1
        %451 = vperm.xlu0 %450, %v328
        %v452 = vpop.permute.xlu0 %451
        %454 = vset.pattern.permute.xlu0 1
        %455 = vperm.xlu0 %454, %v329
        %v456 = vpop.permute.xlu0 %455
        %458 = vset.pattern.permute.xlu0 1
        %459 = vperm.xlu0 %458, %v330
        %v460 = vpop.permute.xlu0 %459
        %462 = vset.pattern.permute.xlu0 1
        %463 = vperm.xlu0 %462, %v331
        %v464 = vpop.permute.xlu0 %463
        %466 = vset.pattern.permute.xlu0 1
        %467 = vperm.xlu0 %466, %v332
        %v468 = vpop.permute.xlu0 %467
        %470 = vset.pattern.permute.xlu0 1
        %471 = vperm.xlu0 %470, %v333
        %v472 = vpop.permute.xlu0 %471
        %474 = vset.pattern.permute.xlu0 1
        %475 = vperm.xlu0 %474, %v334
        %v476 = vpop.permute.xlu0 %475
        %478 = vset.pattern.permute.xlu0 1
        %479 = vperm.xlu0 %478, %v335
        %v480 = vpop.permute.xlu0 %479
        %482 = vset.pattern.permute.xlu0 1
        %483 = vperm.xlu0 %482, %v336
        %v484 = vpop.permute.xlu0 %483
        %486 = vset.pattern.permute.xlu0 1
        %487 = vperm.xlu0 %486, %v337
        %v488 = vpop.permute.xlu0 %487
        %490 = vset.pattern.permute.xlu0 1
        %491 = vperm.xlu0 %490, %v338
        %v492 = vpop.permute.xlu0 %491
        %494 = vset.pattern.permute.xlu0 1
        %495 = vperm.xlu0 %494, %v339
        %v496 = vpop.permute.xlu0 %495
        %498 = vset.pattern.permute.xlu0 1
        %499 = vperm.xlu0 %498, %v340
        %v500 = vpop.permute.xlu0 %499
        %502 = vset.pattern.permute.xlu0 1
        %503 = vperm.xlu0 %502, %v341
        %v504 = vpop.permute.xlu0 %503
        %506 = vset.pattern.permute.xlu0 1
        %507 = vperm.xlu0 %506, %v342
        %v508 = vpop.permute.xlu0 %507
        %v510 = vlaneseq
        %v511 = vshrl.u32 %v510, 7
        %v512 = vsub.s32 1, %v511
        %v513 = vrot.slane %v345, %v512
        %vm514 = vcmp.eq.f32.partialorder %v448, %v513
        %vm515 = vcmp.eq.f32.partialorder %v452, %v513
        %vm516 = vcmp.eq.f32.partialorder %v456, %v513
        %vm517 = vcmp.eq.f32.partialorder %v460, %v513
        %vm518 = vcmp.eq.f32.partialorder %v464, %v513
        %vm519 = vcmp.eq.f32.partialorder %v468, %v513
        %vm520 = vcmp.eq.f32.partialorder %v472, %v513
        %vm521 = vcmp.eq.f32.partialorder %v476, %v513
        %vm522 = vcmp.eq.f32.partialorder %v480, %v513
        %vm523 = vcmp.eq.f32.partialorder %v484, %v513
        %vm524 = vcmp.eq.f32.partialorder %v488, %v513
        %vm525 = vcmp.eq.f32.partialorder %v492, %v513
        %vm526 = vcmp.eq.f32.partialorder %v496, %v513
        %vm527 = vcmp.eq.f32.partialorder %v500, %v513
        %vm528 = vcmp.eq.f32.partialorder %v504, %v513
        %vm529 = vcmp.eq.f32.partialorder %v508, %v513
        %vm530 = vmand %vm430, %vm514
        %vm531 = vmand %vm431, %vm515
        %vm532 = vmand %vm432, %vm516
        %vm533 = vmand %vm433, %vm517
        %vm534 = vmand %vm434, %vm518
        %vm535 = vmand %vm435, %vm519
        %vm536 = vmand %vm436, %vm520
        %vm537 = vmand %vm437, %vm521
        %vm538 = vmand %vm438, %vm522
        %vm539 = vmand %vm439, %vm523
        %vm540 = vmand %vm440, %vm524
        %vm541 = vmand %vm441, %vm525
        %vm542 = vmand %vm442, %vm526
        %vm543 = vmand %vm443, %vm527
        %vm544 = vmand %vm444, %vm528
        %vm545 = vmand %vm445, %vm529
        %546 = vset.pattern.permute.xlu0 2
        %547 = vperm.xlu0 %546, %v327
        %v548 = vpop.permute.xlu0 %547
        %550 = vset.pattern.permute.xlu0 2
        %551 = vperm.xlu0 %550, %v328
        %v552 = vpop.permute.xlu0 %551
        %554 = vset.pattern.permute.xlu0 2
        %555 = vperm.xlu0 %554, %v329
        %v556 = vpop.permute.xlu0 %555
        %558 = vset.pattern.permute.xlu0 2
        %559 = vperm.xlu0 %558, %v330
        %v560 = vpop.permute.xlu0 %559
        %562 = vset.pattern.permute.xlu0 2
        %563 = vperm.xlu0 %562, %v331
        %v564 = vpop.permute.xlu0 %563
        %566 = vset.pattern.permute.xlu0 2
        %567 = vperm.xlu0 %566, %v332
        %v568 = vpop.permute.xlu0 %567
        %570 = vset.pattern.permute.xlu0 2
        %571 = vperm.xlu0 %570, %v333
        %v572 = vpop.permute.xlu0 %571
        %574 = vset.pattern.permute.xlu0 2
        %575 = vperm.xlu0 %574, %v334
        %v576 = vpop.permute.xlu0 %575
        %578 = vset.pattern.permute.xlu0 2
        %579 = vperm.xlu0 %578, %v335
        %v580 = vpop.permute.xlu0 %579
        %582 = vset.pattern.permute.xlu0 2
        %583 = vperm.xlu0 %582, %v336
        %v584 = vpop.permute.xlu0 %583
        %586 = vset.pattern.permute.xlu0 2
        %587 = vperm.xlu0 %586, %v337
        %v588 = vpop.permute.xlu0 %587
        %590 = vset.pattern.permute.xlu0 2
        %591 = vperm.xlu0 %590, %v338
        %v592 = vpop.permute.xlu0 %591
        %594 = vset.pattern.permute.xlu0 2
        %595 = vperm.xlu0 %594, %v339
        %v596 = vpop.permute.xlu0 %595
        %598 = vset.pattern.permute.xlu0 2
        %599 = vperm.xlu0 %598, %v340
        %v600 = vpop.permute.xlu0 %599
        %602 = vset.pattern.permute.xlu0 2
        %603 = vperm.xlu0 %602, %v341
        %v604 = vpop.permute.xlu0 %603
        %606 = vset.pattern.permute.xlu0 2
        %607 = vperm.xlu0 %606, %v342
        %v608 = vpop.permute.xlu0 %607
        %v610 = vlaneseq
        %v611 = vshrl.u32 %v610, 7
        %v612 = vsub.s32 2, %v611
        %v613 = vrot.slane %v345, %v612
        %vm614 = vcmp.eq.f32.partialorder %v548, %v613
        %vm615 = vcmp.eq.f32.partialorder %v552, %v613
        %vm616 = vcmp.eq.f32.partialorder %v556, %v613
        %vm617 = vcmp.eq.f32.partialorder %v560, %v613
        %vm618 = vcmp.eq.f32.partialorder %v564, %v613
        %vm619 = vcmp.eq.f32.partialorder %v568, %v613
        %vm620 = vcmp.eq.f32.partialorder %v572, %v613
        %vm621 = vcmp.eq.f32.partialorder %v576, %v613
        %vm622 = vcmp.eq.f32.partialorder %v580, %v613
        %vm623 = vcmp.eq.f32.partialorder %v584, %v613
        %vm624 = vcmp.eq.f32.partialorder %v588, %v613
        %vm625 = vcmp.eq.f32.partialorder %v592, %v613
        %vm626 = vcmp.eq.f32.partialorder %v596, %v613
        %vm627 = vcmp.eq.f32.partialorder %v600, %v613
        %vm628 = vcmp.eq.f32.partialorder %v604, %v613
        %vm629 = vcmp.eq.f32.partialorder %v608, %v613
        %vm630 = vmand %vm530, %vm614
        %vm631 = vmand %vm531, %vm615
        %vm632 = vmand %vm532, %vm616
        %vm633 = vmand %vm533, %vm617
        %vm634 = vmand %vm534, %vm618
        %vm635 = vmand %vm535, %vm619
        %vm636 = vmand %vm536, %vm620
        %vm637 = vmand %vm537, %vm621
        %vm638 = vmand %vm538, %vm622
        %vm639 = vmand %vm539, %vm623
        %vm640 = vmand %vm540, %vm624
        %vm641 = vmand %vm541, %vm625
        %vm642 = vmand %vm542, %vm626
        %vm643 = vmand %vm543, %vm627
        %vm644 = vmand %vm544, %vm628
        %vm645 = vmand %vm545, %vm629
        %v646 = vsel %vm630, 1, 0
        %v647 = vsel %vm631, 1, 0
        %v648 = vsel %vm632, 1, 0
        %v649 = vsel %vm633, 1, 0
        %v650 = vsel %vm634, 1, 0
        %v651 = vsel %vm635, 1, 0
        %v652 = vsel %vm636, 1, 0
        %v653 = vsel %vm637, 1, 0
        %v654 = vsel %vm638, 1, 0
        %v655 = vsel %vm639, 1, 0
        %v656 = vsel %vm640, 1, 0
        %v657 = vsel %vm641, 1, 0
        %v658 = vsel %vm642, 1, 0
        %v659 = vsel %vm643, 1, 0
        %v660 = vsel %vm644, 1, 0
        %v661 = vsel %vm645, 1, 0
        %v662 = vcvt.s32.f32 %v646
        %v663 = vcvt.s32.f32 %v647
        %v664 = vcvt.s32.f32 %v648
        %v665 = vcvt.s32.f32 %v649
        %v666 = vcvt.s32.f32 %v650
        %v667 = vcvt.s32.f32 %v651
        %v668 = vcvt.s32.f32 %v652
        %v669 = vcvt.s32.f32 %v653
        %v670 = vcvt.s32.f32 %v654
        %v671 = vcvt.s32.f32 %v655
        %v672 = vcvt.s32.f32 %v656
        %v673 = vcvt.s32.f32 %v657
        %v674 = vcvt.s32.f32 %v658
        %v675 = vcvt.s32.f32 %v659
        %v676 = vcvt.s32.f32 %v660
        %v677 = vcvt.s32.f32 %v661
        %v678 = vadd.f32 %v662, %v663
        %v679 = vadd.f32 %v678, %v664
        %v680 = vadd.f32 %v679, %v665
        %v681 = vadd.f32 %v680, %v666
        %v682 = vadd.f32 %v681, %v667
        %v683 = vadd.f32 %v682, %v668
        %v684 = vadd.f32 %v683, %v669
        %v685 = vadd.f32 %v684, %v670
        %v686 = vadd.f32 %v685, %v671
        %v687 = vadd.f32 %v686, %v672
        %v688 = vadd.f32 %v687, %v673
        %v689 = vadd.f32 %v688, %v674
        %v690 = vadd.f32 %v689, %v675
        %v691 = vadd.f32 %v690, %v676
        %v692 = vadd.f32 %v691, %v677
        %v693 = vrot.slane %v692, 4
        %v694 = vadd.f32 %v692, %v693
        %v695 = vrot.slane %v694, 2
        %v696 = vadd.f32 %v694, %v695
        %v697 = vrot.slane %v696, 1
        %v698 = vadd.f32 %v696, %v697
        %v699 = vrcp.pop %v698
        %v700 = vmul.f32 1.0, %v699
        %701 = vadd.xlane.f32.xlu0 %v700
        %v702 = vpop.xlane.xlu0 %701
        %v703 = vrcp.pop %v702
        %v704 = vmul.f32 %v700, %v703
        %v705 = vld [vmem:[%s285] sm:$0xff]
        %v706 = vld [vmem:[%s285 + $0x8] sm:$0xff]
        %v707 = vld [vmem:[%s285 + $0x10] sm:$0xff]
        %v708 = vld [vmem:[%s285 + $0x18] sm:$0x3f]
        %v709 = vlaneseq
        %v710 = vshrl.u32 %v709, 7
        %v711 = vsub.s32 0, %v710
        %v712 = vrot.slane %v705, %v711
        %714 = vset.pattern.permute.xlu0 0
        %715 = vperm.xlu0 %714, %v286
        %v716 = vpop.permute.xlu0 %715
        %719 = vset.pattern.permute.xlu0 0
        %720 = vperm.xlu0 %719, %v287
        %v721 = vpop.permute.xlu0 %720
        %724 = vset.pattern.permute.xlu0 0
        %725 = vperm.xlu0 %724, %v288
        %v726 = vpop.permute.xlu0 %725
        %729 = vset.pattern.permute.xlu0 0
        %730 = vperm.xlu0 %729, %v289
        %v731 = vpop.permute.xlu0 %730
        %v733 = vsub.f32 %v712, %v716
        %v734 = vsub.f32 %v712, %v721
        %v735 = vsub.f32 %v712, %v726
        %v736 = vsub.f32 %v712, %v731
        %v737 = vmul.f32 %v733, %v733
        %v738 = vmul.f32 %v734, %v734
        %v739 = vmul.f32 %v735, %v735
        %v740 = vmul.f32 %v736, %v736
        %v741 = vlaneseq
        %v742 = vshrl.u32 %v741, 7
        %v743 = vsub.s32 2, %v742
        %v744 = vrot.slane %v706, %v743
        %745 = vset.pattern.permute.xlu0 1
        %746 = vperm.xlu0 %745, %v286
        %v747 = vpop.permute.xlu0 %746
        %749 = vset.pattern.permute.xlu0 1
        %750 = vperm.xlu0 %749, %v287
        %v751 = vpop.permute.xlu0 %750
        %753 = vset.pattern.permute.xlu0 1
        %754 = vperm.xlu0 %753, %v288
        %v755 = vpop.permute.xlu0 %754
        %757 = vset.pattern.permute.xlu0 1
        %758 = vperm.xlu0 %757, %v289
        %v759 = vpop.permute.xlu0 %758
        %v761 = vsub.f32 %v744, %v747
        %v762 = vsub.f32 %v744, %v751
        %v763 = vsub.f32 %v744, %v755
        %v764 = vsub.f32 %v744, %v759
        %v765 = vmul.f32 %v761, %v761
        %v766 = vmul.f32 %v762, %v762
        %v767 = vmul.f32 %v763, %v763
        %v768 = vmul.f32 %v764, %v764
        %v769 = vadd.f32 %v737, %v765
        %v770 = vadd.f32 %v738, %v766
        %v771 = vadd.f32 %v739, %v767
        %v772 = vadd.f32 %v740, %v768
        %v773 = vlaneseq
        %v774 = vshrl.u32 %v773, 7
        %v775 = vsub.s32 4, %v774
        %v776 = vrot.slane %v707, %v775
        %777 = vset.pattern.permute.xlu0 2
        %778 = vperm.xlu0 %777, %v286
        %v779 = vpop.permute.xlu0 %778
        %781 = vset.pattern.permute.xlu0 2
        %782 = vperm.xlu0 %781, %v287
        %v783 = vpop.permute.xlu0 %782
        %785 = vset.pattern.permute.xlu0 2
        %786 = vperm.xlu0 %785, %v288
        %v787 = vpop.permute.xlu0 %786
        %789 = vset.pattern.permute.xlu0 2
        %790 = vperm.xlu0 %789, %v289
        %v791 = vpop.permute.xlu0 %790
        %v793 = vsub.f32 %v776, %v779
        %v794 = vsub.f32 %v776, %v783
        %v795 = vsub.f32 %v776, %v787
        %v796 = vsub.f32 %v776, %v791
        %v797 = vmul.f32 %v793, %v793
        %v798 = vmul.f32 %v794, %v794
        %v799 = vmul.f32 %v795, %v795
        %v800 = vmul.f32 %v796, %v796
        %v801 = vadd.f32 %v769, %v797
        %v802 = vadd.f32 %v770, %v798
        %v803 = vadd.f32 %v771, %v799
        %v804 = vadd.f32 %v772, %v800
        %v805 = vrsqrt.pop %v801
        %v806 = vmul.f32 %v801, %v805
        %vm807 = vcmp.eq.f32.partialorder %v801, inf
        %v808 = vsel %vm807, %v801, %v806
        %vm809 = vcmp.eq.f32.partialorder %v801, 0.0
        %v810 = vand.u32 %v801, 2147483648
        %v811 = vsel %vm809, %v810, %v808
        %v812 = vrsqrt.pop %v802
        %v813 = vmul.f32 %v802, %v812
        %vm814 = vcmp.eq.f32.partialorder %v802, inf
        %v815 = vsel %vm814, %v802, %v813
        %vm816 = vcmp.eq.f32.partialorder %v802, 0.0
        %v817 = vand.u32 %v802, 2147483648
        %v818 = vsel %vm816, %v817, %v815
        %v819 = vrsqrt.pop %v803
        %v820 = vmul.f32 %v803, %v819
        %vm821 = vcmp.eq.f32.partialorder %v803, inf
        %v822 = vsel %vm821, %v803, %v820
        %vm823 = vcmp.eq.f32.partialorder %v803, 0.0
        %v824 = vand.u32 %v803, 2147483648
        %v825 = vsel %vm823, %v824, %v822
        %v826 = vrsqrt.pop %v804
        %v827 = vmul.f32 %v804, %v826
        %vm828 = vcmp.eq.f32.partialorder %v804, inf
        %v829 = vsel %vm828, %v804, %v827
        %vm830 = vcmp.eq.f32.partialorder %v804, 0.0
        %v831 = vand.u32 %v804, 2147483648
        %v832 = vsel %vm830, %v831, %v829
        %v833 = vmul.f32 %v811, 9.523809
        %v834 = vmul.f32 %v818, 9.523809
        %v835 = vmul.f32 %v825, 9.523809
        %v836 = vmul.f32 %v832, 9.523809
        %v837 = vsub.f32 1.0, %v833
        %v838 = vsub.f32 1.0, %v834
        %v839 = vsub.f32 1.0, %v835
        %v840 = vsub.f32 1.0, %v836
        %v841 = vmax.f32 %v837, 0.0
        %v842 = vmax.f32 %v838, 0.0
        %v843 = vmax.f32 %v839, 0.0
        %v844 = vmax.f32 %v840, 0.0
        %v845 = vadd.f32 %v841, 0.0
        %v846 = vadd.f32 %v842, 0.0
        %v847 = vadd.f32 %v843, 0.0
        %v848 = vadd.f32 %v844, 0.0
        %v849 = vlaneseq
        %v850 = vshrl.u32 %v849, 7
        %v851 = vsub.s32 1, %v850
        %v852 = vrot.slane %v705, %v851
        %v853 = vsub.f32 %v852, %v716
        %v854 = vsub.f32 %v852, %v721
        %v855 = vsub.f32 %v852, %v726
        %v856 = vsub.f32 %v852, %v731
        %v857 = vmul.f32 %v853, %v853
        %v858 = vmul.f32 %v854, %v854
        %v859 = vmul.f32 %v855, %v855
        %v860 = vmul.f32 %v856, %v856
        %v861 = vlaneseq
        %v862 = vshrl.u32 %v861, 7
        %v863 = vsub.s32 3, %v862
        %v864 = vrot.slane %v706, %v863
        %v865 = vsub.f32 %v864, %v747
        %v866 = vsub.f32 %v864, %v751
        %v867 = vsub.f32 %v864, %v755
        %v868 = vsub.f32 %v864, %v759
        %v869 = vmul.f32 %v865, %v865
        %v870 = vmul.f32 %v866, %v866
        %v871 = vmul.f32 %v867, %v867
        %v872 = vmul.f32 %v868, %v868
        %v873 = vadd.f32 %v857, %v869
        %v874 = vadd.f32 %v858, %v870
        %v875 = vadd.f32 %v859, %v871
        %v876 = vadd.f32 %v860, %v872
        %v877 = vlaneseq
        %v878 = vshrl.u32 %v877, 7
        %v879 = vsub.s32 5, %v878
        %v880 = vrot.slane %v707, %v879
        %v881 = vsub.f32 %v880, %v779
        %v882 = vsub.f32 %v880, %v783
        %v883 = vsub.f32 %v880, %v787
        %v884 = vsub.f32 %v880, %v791
        %v885 = vmul.f32 %v881, %v881
        %v886 = vmul.f32 %v882, %v882
        %v887 = vmul.f32 %v883, %v883
        %v888 = vmul.f32 %v884, %v884
        %v889 = vadd.f32 %v873, %v885
        %v890 = vadd.f32 %v874, %v886
        %v891 = vadd.f32 %v875, %v887
        %v892 = vadd.f32 %v876, %v888
        %v893 = vrsqrt.pop %v889
        %v894 = vmul.f32 %v889, %v893
        %vm895 = vcmp.eq.f32.partialorder %v889, inf
        %v896 = vsel %vm895, %v889, %v894
        %vm897 = vcmp.eq.f32.partialorder %v889, 0.0
        %v898 = vand.u32 %v889, 2147483648
        %v899 = vsel %vm897, %v898, %v896
        %v900 = vrsqrt.pop %v890
        %v901 = vmul.f32 %v890, %v900
        %vm902 = vcmp.eq.f32.partialorder %v890, inf
        %v903 = vsel %vm902, %v890, %v901
        %vm904 = vcmp.eq.f32.partialorder %v890, 0.0
        %v905 = vand.u32 %v890, 2147483648
        %v906 = vsel %vm904, %v905, %v903
        %v907 = vrsqrt.pop %v891
        %v908 = vmul.f32 %v891, %v907
        %vm909 = vcmp.eq.f32.partialorder %v891, inf
        %v910 = vsel %vm909, %v891, %v908
        %vm911 = vcmp.eq.f32.partialorder %v891, 0.0
        %v912 = vand.u32 %v891, 2147483648
        %v913 = vsel %vm911, %v912, %v910
        %v914 = vrsqrt.pop %v892
        %v915 = vmul.f32 %v892, %v914
        %vm916 = vcmp.eq.f32.partialorder %v892, inf
        %v917 = vsel %vm916, %v892, %v915
        %vm918 = vcmp.eq.f32.partialorder %v892, 0.0
        %v919 = vand.u32 %v892, 2147483648
        %v920 = vsel %vm918, %v919, %v917
        %v921 = vmul.f32 %v899, 9.523809
        %v922 = vmul.f32 %v906, 9.523809
        %v923 = vmul.f32 %v913, 9.523809
        %v924 = vmul.f32 %v920, 9.523809
        %v925 = vsub.f32 1.0, %v921
        %v926 = vsub.f32 1.0, %v922
        %v927 = vsub.f32 1.0, %v923
        %v928 = vsub.f32 1.0, %v924
        %v929 = vmax.f32 %v925, 0.0
        %v930 = vmax.f32 %v926, 0.0
        %v931 = vmax.f32 %v927, 0.0
        %v932 = vmax.f32 %v928, 0.0
        %v933 = vadd.f32 %v845, %v929
        %v934 = vadd.f32 %v846, %v930
        %v935 = vadd.f32 %v847, %v931
        %v936 = vadd.f32 %v848, %v932
        %v937 = vlaneseq
        %v938 = vshrl.u32 %v937, 7
        %v939 = vsub.s32 2, %v938
        %v940 = vrot.slane %v705, %v939
        %v941 = vsub.f32 %v940, %v716
        %v942 = vsub.f32 %v940, %v721
        %v943 = vsub.f32 %v940, %v726
        %v944 = vsub.f32 %v940, %v731
        %v945 = vmul.f32 %v941, %v941
        %v946 = vmul.f32 %v942, %v942
        %v947 = vmul.f32 %v943, %v943
        %v948 = vmul.f32 %v944, %v944
        %v949 = vlaneseq
        %v950 = vshrl.u32 %v949, 7
        %v951 = vsub.s32 4, %v950
        %v952 = vrot.slane %v706, %v951
        %v953 = vsub.f32 %v952, %v747
        %v954 = vsub.f32 %v952, %v751
        %v955 = vsub.f32 %v952, %v755
        %v956 = vsub.f32 %v952, %v759
        %v957 = vmul.f32 %v953, %v953
        %v958 = vmul.f32 %v954, %v954
        %v959 = vmul.f32 %v955, %v955
        %v960 = vmul.f32 %v956, %v956
        %v961 = vadd.f32 %v945, %v957
        %v962 = vadd.f32 %v946, %v958
        %v963 = vadd.f32 %v947, %v959
        %v964 = vadd.f32 %v948, %v960
        %v965 = vlaneseq
        %v966 = vshrl.u32 %v965, 7
        %v967 = vsub.s32 6, %v966
        %v968 = vrot.slane %v707, %v967
        %v969 = vsub.f32 %v968, %v779
        %v970 = vsub.f32 %v968, %v783
        %v971 = vsub.f32 %v968, %v787
        %v972 = vsub.f32 %v968, %v791
        %v973 = vmul.f32 %v969, %v969
        %v974 = vmul.f32 %v970, %v970
        %v975 = vmul.f32 %v971, %v971
        %v976 = vmul.f32 %v972, %v972
        %v977 = vadd.f32 %v961, %v973
        %v978 = vadd.f32 %v962, %v974
        %v979 = vadd.f32 %v963, %v975
        %v980 = vadd.f32 %v964, %v976
        %v981 = vrsqrt.pop %v977
        %v982 = vmul.f32 %v977, %v981
        %vm983 = vcmp.eq.f32.partialorder %v977, inf
        %v984 = vsel %vm983, %v977, %v982
        %vm985 = vcmp.eq.f32.partialorder %v977, 0.0
        %v986 = vand.u32 %v977, 2147483648
        %v987 = vsel %vm985, %v986, %v984
        %v988 = vrsqrt.pop %v978
        %v989 = vmul.f32 %v978, %v988
        %vm990 = vcmp.eq.f32.partialorder %v978, inf
        %v991 = vsel %vm990, %v978, %v989
        %vm992 = vcmp.eq.f32.partialorder %v978, 0.0
        %v993 = vand.u32 %v978, 2147483648
        %v994 = vsel %vm992, %v993, %v991
        %v995 = vrsqrt.pop %v979
        %v996 = vmul.f32 %v979, %v995
        %vm997 = vcmp.eq.f32.partialorder %v979, inf
        %v998 = vsel %vm997, %v979, %v996
        %vm999 = vcmp.eq.f32.partialorder %v979, 0.0
        %v1000 = vand.u32 %v979, 2147483648
        %v1001 = vsel %vm999, %v1000, %v998
        %v1002 = vrsqrt.pop %v980
        %v1003 = vmul.f32 %v980, %v1002
        %vm1004 = vcmp.eq.f32.partialorder %v980, inf
        %v1005 = vsel %vm1004, %v980, %v1003
        %vm1006 = vcmp.eq.f32.partialorder %v980, 0.0
        %v1007 = vand.u32 %v980, 2147483648
        %v1008 = vsel %vm1006, %v1007, %v1005
        %v1009 = vmul.f32 %v987, 9.523809
        %v1010 = vmul.f32 %v994, 9.523809
        %v1011 = vmul.f32 %v1001, 9.523809
        %v1012 = vmul.f32 %v1008, 9.523809
        %v1013 = vsub.f32 1.0, %v1009
        %v1014 = vsub.f32 1.0, %v1010
        %v1015 = vsub.f32 1.0, %v1011
        %v1016 = vsub.f32 1.0, %v1012
        %v1017 = vmax.f32 %v1013, 0.0
        %v1018 = vmax.f32 %v1014, 0.0
        %v1019 = vmax.f32 %v1015, 0.0
        %v1020 = vmax.f32 %v1016, 0.0
        %v1021 = vadd.f32 %v933, %v1017
        %v1022 = vadd.f32 %v934, %v1018
        %v1023 = vadd.f32 %v935, %v1019
        %v1024 = vadd.f32 %v936, %v1020
        %v1025 = vlaneseq
        %v1026 = vshrl.u32 %v1025, 7
        %v1027 = vsub.s32 3, %v1026
        %v1028 = vrot.slane %v705, %v1027
        %v1029 = vsub.f32 %v1028, %v716
        %v1030 = vsub.f32 %v1028, %v721
        %v1031 = vsub.f32 %v1028, %v726
        %v1032 = vsub.f32 %v1028, %v731
        %v1033 = vmul.f32 %v1029, %v1029
        %v1034 = vmul.f32 %v1030, %v1030
        %v1035 = vmul.f32 %v1031, %v1031
        %v1036 = vmul.f32 %v1032, %v1032
        %v1037 = vlaneseq
        %v1038 = vshrl.u32 %v1037, 7
        %v1039 = vsub.s32 5, %v1038
        %v1040 = vrot.slane %v706, %v1039
        %v1041 = vsub.f32 %v1040, %v747
        %v1042 = vsub.f32 %v1040, %v751
        %v1043 = vsub.f32 %v1040, %v755
        %v1044 = vsub.f32 %v1040, %v759
        %v1045 = vmul.f32 %v1041, %v1041
        %v1046 = vmul.f32 %v1042, %v1042
        %v1047 = vmul.f32 %v1043, %v1043
        %v1048 = vmul.f32 %v1044, %v1044
        %v1049 = vadd.f32 %v1033, %v1045
        %v1050 = vadd.f32 %v1034, %v1046
        %v1051 = vadd.f32 %v1035, %v1047
        %v1052 = vadd.f32 %v1036, %v1048
        %v1053 = vlaneseq
        %v1054 = vshrl.u32 %v1053, 7
        %v1055 = vsub.s32 7, %v1054
        %v1056 = vrot.slane %v707, %v1055
        %v1057 = vsub.f32 %v1056, %v779
        %v1058 = vsub.f32 %v1056, %v783
        %v1059 = vsub.f32 %v1056, %v787
        %v1060 = vsub.f32 %v1056, %v791
        %v1061 = vmul.f32 %v1057, %v1057
        %v1062 = vmul.f32 %v1058, %v1058
        %v1063 = vmul.f32 %v1059, %v1059
        %v1064 = vmul.f32 %v1060, %v1060
        %v1065 = vadd.f32 %v1049, %v1061
        %v1066 = vadd.f32 %v1050, %v1062
        %v1067 = vadd.f32 %v1051, %v1063
        %v1068 = vadd.f32 %v1052, %v1064
        %v1069 = vrsqrt.pop %v1065
        %v1070 = vmul.f32 %v1065, %v1069
        %vm1071 = vcmp.eq.f32.partialorder %v1065, inf
        %v1072 = vsel %vm1071, %v1065, %v1070
        %vm1073 = vcmp.eq.f32.partialorder %v1065, 0.0
        %v1074 = vand.u32 %v1065, 2147483648
        %v1075 = vsel %vm1073, %v1074, %v1072
        %v1076 = vrsqrt.pop %v1066
        %v1077 = vmul.f32 %v1066, %v1076
        %vm1078 = vcmp.eq.f32.partialorder %v1066, inf
        %v1079 = vsel %vm1078, %v1066, %v1077
        %vm1080 = vcmp.eq.f32.partialorder %v1066, 0.0
        %v1081 = vand.u32 %v1066, 2147483648
        %v1082 = vsel %vm1080, %v1081, %v1079
        %v1083 = vrsqrt.pop %v1067
        %v1084 = vmul.f32 %v1067, %v1083
        %vm1085 = vcmp.eq.f32.partialorder %v1067, inf
        %v1086 = vsel %vm1085, %v1067, %v1084
        %vm1087 = vcmp.eq.f32.partialorder %v1067, 0.0
        %v1088 = vand.u32 %v1067, 2147483648
        %v1089 = vsel %vm1087, %v1088, %v1086
        %v1090 = vrsqrt.pop %v1068
        %v1091 = vmul.f32 %v1068, %v1090
        %vm1092 = vcmp.eq.f32.partialorder %v1068, inf
        %v1093 = vsel %vm1092, %v1068, %v1091
        %vm1094 = vcmp.eq.f32.partialorder %v1068, 0.0
        %v1095 = vand.u32 %v1068, 2147483648
        %v1096 = vsel %vm1094, %v1095, %v1093
        %v1097 = vmul.f32 %v1075, 9.523809
        %v1098 = vmul.f32 %v1082, 9.523809
        %v1099 = vmul.f32 %v1089, 9.523809
        %v1100 = vmul.f32 %v1096, 9.523809
        %v1101 = vsub.f32 1.0, %v1097
        %v1102 = vsub.f32 1.0, %v1098
        %v1103 = vsub.f32 1.0, %v1099
        %v1104 = vsub.f32 1.0, %v1100
        %v1105 = vmax.f32 %v1101, 0.0
        %v1106 = vmax.f32 %v1102, 0.0
        %v1107 = vmax.f32 %v1103, 0.0
        %v1108 = vmax.f32 %v1104, 0.0
        %v1109 = vadd.f32 %v1021, %v1105
        %v1110 = vadd.f32 %v1022, %v1106
        %v1111 = vadd.f32 %v1023, %v1107
        %v1112 = vadd.f32 %v1024, %v1108
        %v1113 = vlaneseq
        %v1114 = vshrl.u32 %v1113, 7
        %v1115 = vsub.s32 4, %v1114
        %v1116 = vrot.slane %v705, %v1115
        %v1117 = vsub.f32 %v1116, %v716
        %v1118 = vsub.f32 %v1116, %v721
        %v1119 = vsub.f32 %v1116, %v726
        %v1120 = vsub.f32 %v1116, %v731
        %v1121 = vmul.f32 %v1117, %v1117
        %v1122 = vmul.f32 %v1118, %v1118
        %v1123 = vmul.f32 %v1119, %v1119
        %v1124 = vmul.f32 %v1120, %v1120
        %v1125 = vlaneseq
        %v1126 = vshrl.u32 %v1125, 7
        %v1127 = vsub.s32 6, %v1126
        %v1128 = vrot.slane %v706, %v1127
        %v1129 = vsub.f32 %v1128, %v747
        %v1130 = vsub.f32 %v1128, %v751
        %v1131 = vsub.f32 %v1128, %v755
        %v1132 = vsub.f32 %v1128, %v759
        %v1133 = vmul.f32 %v1129, %v1129
        %v1134 = vmul.f32 %v1130, %v1130
        %v1135 = vmul.f32 %v1131, %v1131
        %v1136 = vmul.f32 %v1132, %v1132
        %v1137 = vadd.f32 %v1121, %v1133
        %v1138 = vadd.f32 %v1122, %v1134
        %v1139 = vadd.f32 %v1123, %v1135
        %v1140 = vadd.f32 %v1124, %v1136
        %v1141 = vlaneseq
        %v1142 = vshrl.u32 %v1141, 7
        %v1143 = vsub.s32 0, %v1142
        %v1144 = vrot.slane %v708, %v1143
        %v1145 = vsub.f32 %v1144, %v779
        %v1146 = vsub.f32 %v1144, %v783
        %v1147 = vsub.f32 %v1144, %v787
        %v1148 = vsub.f32 %v1144, %v791
        %v1149 = vmul.f32 %v1145, %v1145
        %v1150 = vmul.f32 %v1146, %v1146
        %v1151 = vmul.f32 %v1147, %v1147
        %v1152 = vmul.f32 %v1148, %v1148
        %v1153 = vadd.f32 %v1137, %v1149
        %v1154 = vadd.f32 %v1138, %v1150
        %v1155 = vadd.f32 %v1139, %v1151
        %v1156 = vadd.f32 %v1140, %v1152
        %v1157 = vrsqrt.pop %v1153
        %v1158 = vmul.f32 %v1153, %v1157
        %vm1159 = vcmp.eq.f32.partialorder %v1153, inf
        %v1160 = vsel %vm1159, %v1153, %v1158
        %vm1161 = vcmp.eq.f32.partialorder %v1153, 0.0
        %v1162 = vand.u32 %v1153, 2147483648
        %v1163 = vsel %vm1161, %v1162, %v1160
        %v1164 = vrsqrt.pop %v1154
        %v1165 = vmul.f32 %v1154, %v1164
        %vm1166 = vcmp.eq.f32.partialorder %v1154, inf
        %v1167 = vsel %vm1166, %v1154, %v1165
        %vm1168 = vcmp.eq.f32.partialorder %v1154, 0.0
        %v1169 = vand.u32 %v1154, 2147483648
        %v1170 = vsel %vm1168, %v1169, %v1167
        %v1171 = vrsqrt.pop %v1155
        %v1172 = vmul.f32 %v1155, %v1171
        %vm1173 = vcmp.eq.f32.partialorder %v1155, inf
        %v1174 = vsel %vm1173, %v1155, %v1172
        %vm1175 = vcmp.eq.f32.partialorder %v1155, 0.0
        %v1176 = vand.u32 %v1155, 2147483648
        %v1177 = vsel %vm1175, %v1176, %v1174
        %v1178 = vrsqrt.pop %v1156
        %v1179 = vmul.f32 %v1156, %v1178
        %vm1180 = vcmp.eq.f32.partialorder %v1156, inf
        %v1181 = vsel %vm1180, %v1156, %v1179
        %vm1182 = vcmp.eq.f32.partialorder %v1156, 0.0
        %v1183 = vand.u32 %v1156, 2147483648
        %v1184 = vsel %vm1182, %v1183, %v1181
        %v1185 = vmul.f32 %v1163, 9.523809
        %v1186 = vmul.f32 %v1170, 9.523809
        %v1187 = vmul.f32 %v1177, 9.523809
        %v1188 = vmul.f32 %v1184, 9.523809
        %v1189 = vsub.f32 1.0, %v1185
        %v1190 = vsub.f32 1.0, %v1186
        %v1191 = vsub.f32 1.0, %v1187
        %v1192 = vsub.f32 1.0, %v1188
        %v1193 = vmax.f32 %v1189, 0.0
        %v1194 = vmax.f32 %v1190, 0.0
        %v1195 = vmax.f32 %v1191, 0.0
        %v1196 = vmax.f32 %v1192, 0.0
        %v1197 = vadd.f32 %v1109, %v1193
        %v1198 = vadd.f32 %v1110, %v1194
        %v1199 = vadd.f32 %v1111, %v1195
        %v1200 = vadd.f32 %v1112, %v1196
        %v1201 = vlaneseq
        %v1202 = vshrl.u32 %v1201, 7
        %v1203 = vsub.s32 5, %v1202
        %v1204 = vrot.slane %v705, %v1203
        %v1205 = vsub.f32 %v1204, %v716
        %v1206 = vsub.f32 %v1204, %v721
        %v1207 = vsub.f32 %v1204, %v726
        %v1208 = vsub.f32 %v1204, %v731
        %v1209 = vmul.f32 %v1205, %v1205
        %v1210 = vmul.f32 %v1206, %v1206
        %v1211 = vmul.f32 %v1207, %v1207
        %v1212 = vmul.f32 %v1208, %v1208
        %v1213 = vlaneseq
        %v1214 = vshrl.u32 %v1213, 7
        %v1215 = vsub.s32 7, %v1214
        %v1216 = vrot.slane %v706, %v1215
        %v1217 = vsub.f32 %v1216, %v747
        %v1218 = vsub.f32 %v1216, %v751
        %v1219 = vsub.f32 %v1216, %v755
        %v1220 = vsub.f32 %v1216, %v759
        %v1221 = vmul.f32 %v1217, %v1217
        %v1222 = vmul.f32 %v1218, %v1218
        %v1223 = vmul.f32 %v1219, %v1219
        %v1224 = vmul.f32 %v1220, %v1220
        %v1225 = vadd.f32 %v1209, %v1221
        %v1226 = vadd.f32 %v1210, %v1222
        %v1227 = vadd.f32 %v1211, %v1223
        %v1228 = vadd.f32 %v1212, %v1224
        %v1229 = vlaneseq
        %v1230 = vshrl.u32 %v1229, 7
        %v1231 = vsub.s32 1, %v1230
        %v1232 = vrot.slane %v708, %v1231
        %v1233 = vsub.f32 %v1232, %v779
        %v1234 = vsub.f32 %v1232, %v783
        %v1235 = vsub.f32 %v1232, %v787
        %v1236 = vsub.f32 %v1232, %v791
        %v1237 = vmul.f32 %v1233, %v1233
        %v1238 = vmul.f32 %v1234, %v1234
        %v1239 = vmul.f32 %v1235, %v1235
        %v1240 = vmul.f32 %v1236, %v1236
        %v1241 = vadd.f32 %v1225, %v1237
        %v1242 = vadd.f32 %v1226, %v1238
        %v1243 = vadd.f32 %v1227, %v1239
        %v1244 = vadd.f32 %v1228, %v1240
        %v1245 = vrsqrt.pop %v1241
        %v1246 = vmul.f32 %v1241, %v1245
        %vm1247 = vcmp.eq.f32.partialorder %v1241, inf
        %v1248 = vsel %vm1247, %v1241, %v1246
        %vm1249 = vcmp.eq.f32.partialorder %v1241, 0.0
        %v1250 = vand.u32 %v1241, 2147483648
        %v1251 = vsel %vm1249, %v1250, %v1248
        %v1252 = vrsqrt.pop %v1242
        %v1253 = vmul.f32 %v1242, %v1252
        %vm1254 = vcmp.eq.f32.partialorder %v1242, inf
        %v1255 = vsel %vm1254, %v1242, %v1253
        %vm1256 = vcmp.eq.f32.partialorder %v1242, 0.0
        %v1257 = vand.u32 %v1242, 2147483648
        %v1258 = vsel %vm1256, %v1257, %v1255
        %v1259 = vrsqrt.pop %v1243
        %v1260 = vmul.f32 %v1243, %v1259
        %vm1261 = vcmp.eq.f32.partialorder %v1243, inf
        %v1262 = vsel %vm1261, %v1243, %v1260
        %vm1263 = vcmp.eq.f32.partialorder %v1243, 0.0
        %v1264 = vand.u32 %v1243, 2147483648
        %v1265 = vsel %vm1263, %v1264, %v1262
        %v1266 = vrsqrt.pop %v1244
        %v1267 = vmul.f32 %v1244, %v1266
        %vm1268 = vcmp.eq.f32.partialorder %v1244, inf
        %v1269 = vsel %vm1268, %v1244, %v1267
        %vm1270 = vcmp.eq.f32.partialorder %v1244, 0.0
        %v1271 = vand.u32 %v1244, 2147483648
        %v1272 = vsel %vm1270, %v1271, %v1269
        %v1273 = vmul.f32 %v1251, 9.523809
        %v1274 = vmul.f32 %v1258, 9.523809
        %v1275 = vmul.f32 %v1265, 9.523809
        %v1276 = vmul.f32 %v1272, 9.523809
        %v1277 = vsub.f32 1.0, %v1273
        %v1278 = vsub.f32 1.0, %v1274
        %v1279 = vsub.f32 1.0, %v1275
        %v1280 = vsub.f32 1.0, %v1276
        %v1281 = vmax.f32 %v1277, 0.0
        %v1282 = vmax.f32 %v1278, 0.0
        %v1283 = vmax.f32 %v1279, 0.0
        %v1284 = vmax.f32 %v1280, 0.0
        %v1285 = vadd.f32 %v1197, %v1281
        %v1286 = vadd.f32 %v1198, %v1282
        %v1287 = vadd.f32 %v1199, %v1283
        %v1288 = vadd.f32 %v1200, %v1284
        %v1289 = vlaneseq
        %v1290 = vshrl.u32 %v1289, 7
        %v1291 = vsub.s32 6, %v1290
        %v1292 = vrot.slane %v705, %v1291
        %v1293 = vsub.f32 %v1292, %v716
        %v1294 = vsub.f32 %v1292, %v721
        %v1295 = vsub.f32 %v1292, %v726
        %v1296 = vsub.f32 %v1292, %v731
        %v1297 = vmul.f32 %v1293, %v1293
        %v1298 = vmul.f32 %v1294, %v1294
        %v1299 = vmul.f32 %v1295, %v1295
        %v1300 = vmul.f32 %v1296, %v1296
        %v1301 = vlaneseq
        %v1302 = vshrl.u32 %v1301, 7
        %v1303 = vsub.s32 0, %v1302
        %v1304 = vrot.slane %v707, %v1303
        %v1305 = vsub.f32 %v1304, %v747
        %v1306 = vsub.f32 %v1304, %v751
        %v1307 = vsub.f32 %v1304, %v755
        %v1308 = vsub.f32 %v1304, %v759
        %v1309 = vmul.f32 %v1305, %v1305
        %v1310 = vmul.f32 %v1306, %v1306
        %v1311 = vmul.f32 %v1307, %v1307
        %v1312 = vmul.f32 %v1308, %v1308
        %v1313 = vadd.f32 %v1297, %v1309
        %v1314 = vadd.f32 %v1298, %v1310
        %v1315 = vadd.f32 %v1299, %v1311
        %v1316 = vadd.f32 %v1300, %v1312
        %v1317 = vlaneseq
        %v1318 = vshrl.u32 %v1317, 7
        %v1319 = vsub.s32 2, %v1318
        %v1320 = vrot.slane %v708, %v1319
        %v1321 = vsub.f32 %v1320, %v779
        %v1322 = vsub.f32 %v1320, %v783
        %v1323 = vsub.f32 %v1320, %v787
        %v1324 = vsub.f32 %v1320, %v791
        %v1325 = vmul.f32 %v1321, %v1321
        %v1326 = vmul.f32 %v1322, %v1322
        %v1327 = vmul.f32 %v1323, %v1323
        %v1328 = vmul.f32 %v1324, %v1324
        %v1329 = vadd.f32 %v1313, %v1325
        %v1330 = vadd.f32 %v1314, %v1326
        %v1331 = vadd.f32 %v1315, %v1327
        %v1332 = vadd.f32 %v1316, %v1328
        %v1333 = vrsqrt.pop %v1329
        %v1334 = vmul.f32 %v1329, %v1333
        %vm1335 = vcmp.eq.f32.partialorder %v1329, inf
        %v1336 = vsel %vm1335, %v1329, %v1334
        %vm1337 = vcmp.eq.f32.partialorder %v1329, 0.0
        %v1338 = vand.u32 %v1329, 2147483648
        %v1339 = vsel %vm1337, %v1338, %v1336
        %v1340 = vrsqrt.pop %v1330
        %v1341 = vmul.f32 %v1330, %v1340
        %vm1342 = vcmp.eq.f32.partialorder %v1330, inf
        %v1343 = vsel %vm1342, %v1330, %v1341
        %vm1344 = vcmp.eq.f32.partialorder %v1330, 0.0
        %v1345 = vand.u32 %v1330, 2147483648
        %v1346 = vsel %vm1344, %v1345, %v1343
        %v1347 = vrsqrt.pop %v1331
        %v1348 = vmul.f32 %v1331, %v1347
        %vm1349 = vcmp.eq.f32.partialorder %v1331, inf
        %v1350 = vsel %vm1349, %v1331, %v1348
        %vm1351 = vcmp.eq.f32.partialorder %v1331, 0.0
        %v1352 = vand.u32 %v1331, 2147483648
        %v1353 = vsel %vm1351, %v1352, %v1350
        %v1354 = vrsqrt.pop %v1332
        %v1355 = vmul.f32 %v1332, %v1354
        %vm1356 = vcmp.eq.f32.partialorder %v1332, inf
        %v1357 = vsel %vm1356, %v1332, %v1355
        %vm1358 = vcmp.eq.f32.partialorder %v1332, 0.0
        %v1359 = vand.u32 %v1332, 2147483648
        %v1360 = vsel %vm1358, %v1359, %v1357
        %v1361 = vmul.f32 %v1339, 9.523809
        %v1362 = vmul.f32 %v1346, 9.523809
        %v1363 = vmul.f32 %v1353, 9.523809
        %v1364 = vmul.f32 %v1360, 9.523809
        %v1365 = vsub.f32 1.0, %v1361
        %v1366 = vsub.f32 1.0, %v1362
        %v1367 = vsub.f32 1.0, %v1363
        %v1368 = vsub.f32 1.0, %v1364
        %v1369 = vmax.f32 %v1365, 0.0
        %v1370 = vmax.f32 %v1366, 0.0
        %v1371 = vmax.f32 %v1367, 0.0
        %v1372 = vmax.f32 %v1368, 0.0
        %v1373 = vadd.f32 %v1285, %v1369
        %v1374 = vadd.f32 %v1286, %v1370
        %v1375 = vadd.f32 %v1287, %v1371
        %v1376 = vadd.f32 %v1288, %v1372
        %v1377 = vlaneseq
        %v1378 = vshrl.u32 %v1377, 7
        %v1379 = vsub.s32 7, %v1378
        %v1380 = vrot.slane %v705, %v1379
        %v1381 = vsub.f32 %v1380, %v716
        %v1382 = vsub.f32 %v1380, %v721
        %v1383 = vsub.f32 %v1380, %v726
        %v1384 = vsub.f32 %v1380, %v731
        %v1385 = vmul.f32 %v1381, %v1381
        %v1386 = vmul.f32 %v1382, %v1382
        %v1387 = vmul.f32 %v1383, %v1383
        %v1388 = vmul.f32 %v1384, %v1384
        %v1389 = vlaneseq
        %v1390 = vshrl.u32 %v1389, 7
        %v1391 = vsub.s32 1, %v1390
        %v1392 = vrot.slane %v707, %v1391
        %v1393 = vsub.f32 %v1392, %v747
        %v1394 = vsub.f32 %v1392, %v751
        %v1395 = vsub.f32 %v1392, %v755
        %v1396 = vsub.f32 %v1392, %v759
        %v1397 = vmul.f32 %v1393, %v1393
        %v1398 = vmul.f32 %v1394, %v1394
        %v1399 = vmul.f32 %v1395, %v1395
        %v1400 = vmul.f32 %v1396, %v1396
        %v1401 = vadd.f32 %v1385, %v1397
        %v1402 = vadd.f32 %v1386, %v1398
        %v1403 = vadd.f32 %v1387, %v1399
        %v1404 = vadd.f32 %v1388, %v1400
        %v1405 = vlaneseq
        %v1406 = vshrl.u32 %v1405, 7
        %v1407 = vsub.s32 3, %v1406
        %v1408 = vrot.slane %v708, %v1407
        %v1409 = vsub.f32 %v1408, %v779
        %v1410 = vsub.f32 %v1408, %v783
        %v1411 = vsub.f32 %v1408, %v787
        %v1412 = vsub.f32 %v1408, %v791
        %v1413 = vmul.f32 %v1409, %v1409
        %v1414 = vmul.f32 %v1410, %v1410
        %v1415 = vmul.f32 %v1411, %v1411
        %v1416 = vmul.f32 %v1412, %v1412
        %v1417 = vadd.f32 %v1401, %v1413
        %v1418 = vadd.f32 %v1402, %v1414
        %v1419 = vadd.f32 %v1403, %v1415
        %v1420 = vadd.f32 %v1404, %v1416
        %v1421 = vrsqrt.pop %v1417
        %v1422 = vmul.f32 %v1417, %v1421
        %vm1423 = vcmp.eq.f32.partialorder %v1417, inf
        %v1424 = vsel %vm1423, %v1417, %v1422
        %vm1425 = vcmp.eq.f32.partialorder %v1417, 0.0
        %v1426 = vand.u32 %v1417, 2147483648
        %v1427 = vsel %vm1425, %v1426, %v1424
        %v1428 = vrsqrt.pop %v1418
        %v1429 = vmul.f32 %v1418, %v1428
        %vm1430 = vcmp.eq.f32.partialorder %v1418, inf
        %v1431 = vsel %vm1430, %v1418, %v1429
        %vm1432 = vcmp.eq.f32.partialorder %v1418, 0.0
        %v1433 = vand.u32 %v1418, 2147483648
        %v1434 = vsel %vm1432, %v1433, %v1431
        %v1435 = vrsqrt.pop %v1419
        %v1436 = vmul.f32 %v1419, %v1435
        %vm1437 = vcmp.eq.f32.partialorder %v1419, inf
        %v1438 = vsel %vm1437, %v1419, %v1436
        %vm1439 = vcmp.eq.f32.partialorder %v1419, 0.0
        %v1440 = vand.u32 %v1419, 2147483648
        %v1441 = vsel %vm1439, %v1440, %v1438
        %v1442 = vrsqrt.pop %v1420
        %v1443 = vmul.f32 %v1420, %v1442
        %vm1444 = vcmp.eq.f32.partialorder %v1420, inf
        %v1445 = vsel %vm1444, %v1420, %v1443
        %vm1446 = vcmp.eq.f32.partialorder %v1420, 0.0
        %v1447 = vand.u32 %v1420, 2147483648
        %v1448 = vsel %vm1446, %v1447, %v1445
        %v1449 = vmul.f32 %v1427, 9.523809
        %v1450 = vmul.f32 %v1434, 9.523809
        %v1451 = vmul.f32 %v1441, 9.523809
        %v1452 = vmul.f32 %v1448, 9.523809
        %v1453 = vsub.f32 1.0, %v1449
        %v1454 = vsub.f32 1.0, %v1450
        %v1455 = vsub.f32 1.0, %v1451
        %v1456 = vsub.f32 1.0, %v1452
        %v1457 = vmax.f32 %v1453, 0.0
        %v1458 = vmax.f32 %v1454, 0.0
        %v1459 = vmax.f32 %v1455, 0.0
        %v1460 = vmax.f32 %v1456, 0.0
        %v1461 = vadd.f32 %v1373, %v1457
        %v1462 = vadd.f32 %v1374, %v1458
        %v1463 = vadd.f32 %v1375, %v1459
        %v1464 = vadd.f32 %v1376, %v1460
        %v1465 = vlaneseq
        %v1466 = vshrl.u32 %v1465, 7
        %v1467 = vsub.s32 0, %v1466
        %v1468 = vrot.slane %v706, %v1467
        %v1469 = vsub.f32 %v1468, %v716
        %v1470 = vsub.f32 %v1468, %v721
        %v1471 = vsub.f32 %v1468, %v726
        %v1472 = vsub.f32 %v1468, %v731
        %v1473 = vmul.f32 %v1469, %v1469
        %v1474 = vmul.f32 %v1470, %v1470
        %v1475 = vmul.f32 %v1471, %v1471
        %v1476 = vmul.f32 %v1472, %v1472
        %v1477 = vlaneseq
        %v1478 = vshrl.u32 %v1477, 7
        %v1479 = vsub.s32 2, %v1478
        %v1480 = vrot.slane %v707, %v1479
        %v1481 = vsub.f32 %v1480, %v747
        %v1482 = vsub.f32 %v1480, %v751
        %v1483 = vsub.f32 %v1480, %v755
        %v1484 = vsub.f32 %v1480, %v759
        %v1485 = vmul.f32 %v1481, %v1481
        %v1486 = vmul.f32 %v1482, %v1482
        %v1487 = vmul.f32 %v1483, %v1483
        %v1488 = vmul.f32 %v1484, %v1484
        %v1489 = vadd.f32 %v1473, %v1485
        %v1490 = vadd.f32 %v1474, %v1486
        %v1491 = vadd.f32 %v1475, %v1487
        %v1492 = vadd.f32 %v1476, %v1488
        %v1493 = vlaneseq
        %v1494 = vshrl.u32 %v1493, 7
        %v1495 = vsub.s32 4, %v1494
        %v1496 = vrot.slane %v708, %v1495
        %v1497 = vsub.f32 %v1496, %v779
        %v1498 = vsub.f32 %v1496, %v783
        %v1499 = vsub.f32 %v1496, %v787
        %v1500 = vsub.f32 %v1496, %v791
        %v1501 = vmul.f32 %v1497, %v1497
        %v1502 = vmul.f32 %v1498, %v1498
        %v1503 = vmul.f32 %v1499, %v1499
        %v1504 = vmul.f32 %v1500, %v1500
        %v1505 = vadd.f32 %v1489, %v1501
        %v1506 = vadd.f32 %v1490, %v1502
        %v1507 = vadd.f32 %v1491, %v1503
        %v1508 = vadd.f32 %v1492, %v1504
        %v1509 = vrsqrt.pop %v1505
        %v1510 = vmul.f32 %v1505, %v1509
        %vm1511 = vcmp.eq.f32.partialorder %v1505, inf
        %v1512 = vsel %vm1511, %v1505, %v1510
        %vm1513 = vcmp.eq.f32.partialorder %v1505, 0.0
        %v1514 = vand.u32 %v1505, 2147483648
        %v1515 = vsel %vm1513, %v1514, %v1512
        %v1516 = vrsqrt.pop %v1506
        %v1517 = vmul.f32 %v1506, %v1516
        %vm1518 = vcmp.eq.f32.partialorder %v1506, inf
        %v1519 = vsel %vm1518, %v1506, %v1517
        %vm1520 = vcmp.eq.f32.partialorder %v1506, 0.0
        %v1521 = vand.u32 %v1506, 2147483648
        %v1522 = vsel %vm1520, %v1521, %v1519
        %v1523 = vrsqrt.pop %v1507
        %v1524 = vmul.f32 %v1507, %v1523
        %vm1525 = vcmp.eq.f32.partialorder %v1507, inf
        %v1526 = vsel %vm1525, %v1507, %v1524
        %vm1527 = vcmp.eq.f32.partialorder %v1507, 0.0
        %v1528 = vand.u32 %v1507, 2147483648
        %v1529 = vsel %vm1527, %v1528, %v1526
        %v1530 = vrsqrt.pop %v1508
        %v1531 = vmul.f32 %v1508, %v1530
        %vm1532 = vcmp.eq.f32.partialorder %v1508, inf
        %v1533 = vsel %vm1532, %v1508, %v1531
        %vm1534 = vcmp.eq.f32.partialorder %v1508, 0.0
        %v1535 = vand.u32 %v1508, 2147483648
        %v1536 = vsel %vm1534, %v1535, %v1533
        %v1537 = vmul.f32 %v1515, 9.523809
        %v1538 = vmul.f32 %v1522, 9.523809
        %v1539 = vmul.f32 %v1529, 9.523809
        %v1540 = vmul.f32 %v1536, 9.523809
        %v1541 = vsub.f32 1.0, %v1537
        %v1542 = vsub.f32 1.0, %v1538
        %v1543 = vsub.f32 1.0, %v1539
        %v1544 = vsub.f32 1.0, %v1540
        %v1545 = vmax.f32 %v1541, 0.0
        %v1546 = vmax.f32 %v1542, 0.0
        %v1547 = vmax.f32 %v1543, 0.0
        %v1548 = vmax.f32 %v1544, 0.0
        %v1549 = vadd.f32 %v1461, %v1545
        %v1550 = vadd.f32 %v1462, %v1546
        %v1551 = vadd.f32 %v1463, %v1547
        %v1552 = vadd.f32 %v1464, %v1548
        %v1553 = vlaneseq
        %v1554 = vshrl.u32 %v1553, 7
        %v1555 = vsub.s32 1, %v1554
        %v1556 = vrot.slane %v706, %v1555
        %v1557 = vsub.f32 %v1556, %v716
        %v1558 = vsub.f32 %v1556, %v721
        %v1559 = vsub.f32 %v1556, %v726
        %v1560 = vsub.f32 %v1556, %v731
        %v1561 = vmul.f32 %v1557, %v1557
        %v1562 = vmul.f32 %v1558, %v1558
        %v1563 = vmul.f32 %v1559, %v1559
        %v1564 = vmul.f32 %v1560, %v1560
        %v1565 = vlaneseq
        %v1566 = vshrl.u32 %v1565, 7
        %v1567 = vsub.s32 3, %v1566
        %v1568 = vrot.slane %v707, %v1567
        %v1569 = vsub.f32 %v1568, %v747
        %v1570 = vsub.f32 %v1568, %v751
        %v1571 = vsub.f32 %v1568, %v755
        %v1572 = vsub.f32 %v1568, %v759
        %v1573 = vmul.f32 %v1569, %v1569
        %v1574 = vmul.f32 %v1570, %v1570
        %v1575 = vmul.f32 %v1571, %v1571
        %v1576 = vmul.f32 %v1572, %v1572
        %v1577 = vadd.f32 %v1561, %v1573
        %v1578 = vadd.f32 %v1562, %v1574
        %v1579 = vadd.f32 %v1563, %v1575
        %v1580 = vadd.f32 %v1564, %v1576
        %v1581 = vlaneseq
        %v1582 = vshrl.u32 %v1581, 7
        %v1583 = vsub.s32 5, %v1582
        %v1584 = vrot.slane %v708, %v1583
        %v1585 = vsub.f32 %v1584, %v779
        %v1586 = vsub.f32 %v1584, %v783
        %v1587 = vsub.f32 %v1584, %v787
        %v1588 = vsub.f32 %v1584, %v791
        %v1589 = vmul.f32 %v1585, %v1585
        %v1590 = vmul.f32 %v1586, %v1586
        %v1591 = vmul.f32 %v1587, %v1587
        %v1592 = vmul.f32 %v1588, %v1588
        %v1593 = vadd.f32 %v1577, %v1589
        %v1594 = vadd.f32 %v1578, %v1590
        %v1595 = vadd.f32 %v1579, %v1591
        %v1596 = vadd.f32 %v1580, %v1592
        %v1597 = vrsqrt.pop %v1593
        %v1598 = vmul.f32 %v1593, %v1597
        %vm1599 = vcmp.eq.f32.partialorder %v1593, inf
        %v1600 = vsel %vm1599, %v1593, %v1598
        %vm1601 = vcmp.eq.f32.partialorder %v1593, 0.0
        %v1602 = vand.u32 %v1593, 2147483648
        %v1603 = vsel %vm1601, %v1602, %v1600
        %v1604 = vrsqrt.pop %v1594
        %v1605 = vmul.f32 %v1594, %v1604
        %vm1606 = vcmp.eq.f32.partialorder %v1594, inf
        %v1607 = vsel %vm1606, %v1594, %v1605
        %vm1608 = vcmp.eq.f32.partialorder %v1594, 0.0
        %v1609 = vand.u32 %v1594, 2147483648
        %v1610 = vsel %vm1608, %v1609, %v1607
        %v1611 = vrsqrt.pop %v1595
        %v1612 = vmul.f32 %v1595, %v1611
        %vm1613 = vcmp.eq.f32.partialorder %v1595, inf
        %v1614 = vsel %vm1613, %v1595, %v1612
        %vm1615 = vcmp.eq.f32.partialorder %v1595, 0.0
        %v1616 = vand.u32 %v1595, 2147483648
        %v1617 = vsel %vm1615, %v1616, %v1614
        %v1618 = vrsqrt.pop %v1596
        %v1619 = vmul.f32 %v1596, %v1618
        %vm1620 = vcmp.eq.f32.partialorder %v1596, inf
        %v1621 = vsel %vm1620, %v1596, %v1619
        %vm1622 = vcmp.eq.f32.partialorder %v1596, 0.0
        %v1623 = vand.u32 %v1596, 2147483648
        %v1624 = vsel %vm1622, %v1623, %v1621
        %v1625 = vmul.f32 %v1603, 9.523809
        %v1626 = vmul.f32 %v1610, 9.523809
        %v1627 = vmul.f32 %v1617, 9.523809
        %v1628 = vmul.f32 %v1624, 9.523809
        %v1629 = vsub.f32 1.0, %v1625
        %v1630 = vsub.f32 1.0, %v1626
        %v1631 = vsub.f32 1.0, %v1627
        %v1632 = vsub.f32 1.0, %v1628
        %v1633 = vmax.f32 %v1629, 0.0
        %v1634 = vmax.f32 %v1630, 0.0
        %v1635 = vmax.f32 %v1631, 0.0
        %v1636 = vmax.f32 %v1632, 0.0
        %v1637 = vadd.f32 %v1549, %v1633
        %v1638 = vadd.f32 %v1550, %v1634
        %v1639 = vadd.f32 %v1551, %v1635
        %v1640 = vadd.f32 %v1552, %v1636
        %v1641 = vmul.f32 %v1637, %v704
        %v1642 = vmul.f32 %v1638, %v704
        %v1643 = vmul.f32 %v1639, %v704
        %v1644 = vmul.f32 %v1640, %v704
        %1645 = vadd.xlane.f32.xlu0 %v1641
        %v1646 = vpop.xlane.xlu0 %1645
        %1647 = vadd.xlane.f32.xlu0 %v1642
        %v1648 = vpop.xlane.xlu0 %1647
        %1649 = vadd.xlane.f32.xlu0 %v1643
        %v1650 = vpop.xlane.xlu0 %1649
        %1651 = vadd.xlane.f32.xlu0 %v1644
        %v1652 = vpop.xlane.xlu0 %1651
        %v1653 = vmul.f32 %v1646, %v290
        %v1654 = vmul.f32 %v1648, %v291
        %v1655 = vmul.f32 %v1650, %v292
        %v1656 = vmul.f32 %v1652, %v293
        %v1657 = vadd.f32 %v1653, %v1654
        %v1658 = vadd.f32 %v1657, %v1655
        %v1659 = vadd.f32 %v1658, %v1656
        %v1660 = vrot.slane %v1659, 4
        %v1661 = vadd.f32 %v1659, %v1660
        %v1662 = vrot.slane %v1661, 2
        %v1663 = vadd.f32 %v1661, %v1662
        %v1664 = vrot.slane %v1663, 1
        %v1665 = vadd.f32 %v1663, %v1664
        %v1666 = vadd.f32 %v1665, %v294
        %1667 = vst [vmem:[%s271] sm:$0x1] %v1666
        %s1668 = sand.u32 %s169, 1
        %s1669 = scalar_lea.sflag [#allocation3], %s1668
        %s1670 = sand.u32 %s169, 1
        %s1671 = scalar_lea.vmem [#allocation2], %s1670
        // Predicated region
        $region45: #{model_forward.1} parent=43 // pred_check
          %p1672 = pneg %p179
        $region46: #{model_forward.1} parent=43 // pred_check_branch
          %1674 = sbr.rel (%p1672) target = $region48
        $region47: #{model_forward.1} parent=43 // pred_region
          %s1676 = ssub.s32 16, 16
          %1677 = vsyncadd %s1669, %s1676
          %s1678 = smul.addr %s20, 16
          %s1679 = scalar_lea.hbm %s6, %s1678
          %s1681 = sshll.u32 %s1671, 4
          %s1682 = int_to_ptr.vmem [resolvable:$true] %s1681
          %1684 = dma.vmem_to_hbm [thread:$0]  %s1682, 16, %s1679, %s1669
        $region48: #{model_forward.1} parent=43 // pred_fallthru
          _
      $region44: #{model_forward.1} parent=5 // pred_fallthru
        _
      %p1685 = scmp.le.s32.totalorder 2, %s15
      // Predicated region
      $region49: #{model_forward.1} parent=5 // pred_check
        %p1686 = pneg %p1685
      $region50: #{model_forward.1} parent=5 // pred_check_branch
        %1688 = sbr.rel (%p1686) target = $region52
      $region51: #{model_forward.1} parent=5 // pred_region
        %s1689 = ssub.s32 %s15, 2
        // Predicated region
        $region53: #{model_forward.1} parent=51 // pred_check
          %p1690 = pneg %p185
        $region54: #{model_forward.1} parent=51 // pred_check_branch
          %1692 = sbr.rel (%p1690) target = $region56
        $region55: #{model_forward.1} parent=51 // pred_region
          %s1693 = sand.u32 %s170, 1
          %s1694 = scalar_lea.sflag [#allocation3], %s1693
          %s1695 = sand.u32 %s170, 1
          %s1696 = scalar_lea.vmem [#allocation2], %s1695
          %1697 = dma.done %s1694, 16
        $region56: #{model_forward.1} parent=51 // pred_fallthru
          _
      $region52: #{model_forward.1} parent=5 // pred_fallthru
        _
    $region6: #{model_forward.1} parent=1 // loop_footer
      %s19 = sadd.s32 1, %s15
    $region7: #{model_forward.1} parent=1 // loop_footer_branch
      %14 = sbr.rel target = $region3
    $region8: #{model_forward.1} parent=1 // loop_exit
      _
    %1698 = vsyncpa [#allocation3], 1
    %s1699 = scalar_lea.sflag [#allocation3], 1
    %1700 = vsyncpa %s1699, 1

</llo_original>
